<compile_context>
chip_gen: v7x
topology: tpu7x:2x2x1
jax: 0.10.0
libtpu: 0.0.40
codegen_flags: <defaults>
</compile_context>

<pallas_src>
import jax
import jax.numpy as jnp
from jax.experimental import pallas as pl
from jax.experimental.pallas import tpu as pltpu

CONTEXT = 10
IN_DIM = (1 + 2 * CONTEXT) * 13   # 273
HID = 1024
OUT_DIM = 346
OUT_PAD = 384                     # lane-aligned width of W2^T / b2 (zero-padded at init)
BN_EPS = 1e-5

MAX_BATCH_TILE = 2048   # ~27 MiB VMEM at this tile: safe everywhere incl. v7x (64 MiB)
SPLIT_THRESHOLD = 512   # batches >= this get >= 2 grid steps (both v7x TCs busy)


def _round_up(n, m):
    return ((n + m - 1) // m) * m


def _choose_tiling(batch, max_tile=MAX_BATCH_TILE, split_threshold=SPLIT_THRESHOLD):
    """Adaptive M tiling.

    - tiny batches: one block equal to the full batch (no row padding at all)
    - medium/large batches: >= 2 sublane-aligned tiles so the ("parallel",) grid
      axis can shard across both TensorCores on v7x
    - huge batches: tiles capped at max_tile; the last grid block may be partial
      (Pallas masks the out-of-bounds rows).
    """
    num_tiles = pl.cdiv(batch, max_tile)
    if num_tiles == 1 and batch >= split_threshold:
        num_tiles = 2
    if num_tiles == 1:
        # block dim == full array dim is always legal, even if not a multiple of 8
        return batch, 1
    tile = _round_up(pl.cdiv(batch, num_tiles), 8)
    return tile, pl.cdiv(batch, tile)


def mlp_kernel(x_ref, w1_ref, b1_ref, w2_ref, b2_ref, o_ref):
    # f32 -> bf16 cast of the activations happens here (VPU work hidden under the
    # MXU) instead of a separate wrapper-side XLA pass over HBM.
    x = x_ref[...].astype(jnp.bfloat16)
    # layer1 (+ folded BN scale/bias): bf16 operands, f32 accumulation on the MXU.
    h = jnp.dot(x, w1_ref[...], preferred_element_type=jnp.float32)
    # bias + ReLU epilogue in f32 (v5e has no bf16 VALU; VPU has slack on v6e/v7x).
    h = jnp.maximum(h + b1_ref[...], 0.0)
    # layer3: relu(h) @ W2^T, N padded to 384 so the matmul stays lane-aligned.
    y = jnp.dot(h.astype(jnp.bfloat16), w2_ref[...],
                preferred_element_type=jnp.float32)
    y = y + b2_ref[...]
    # Drop the zero-padded output columns in-kernel (offset-0 static slice, free);
    # the store to the 346-wide block uses a masked vst only on the final lane group,
    # which is far cheaper than a wrapper-side slice pass over HBM.
    o_ref[...] = y[:, :OUT_DIM].astype(o_ref.dtype)


def mlp_forward(x, w1_eff, b_eff, w2_t, b2, *, max_batch_tile=MAX_BATCH_TILE,
                out_dtype=jnp.float32):
    """x: any shape whose trailing dims flatten to IN_DIM (mimics x.view(-1, 273)).

    No wrapper-side pad / cast / slice passes.  x may be f32 or bf16; anything else
    is promoted to f32.  Pass out_dtype=jnp.bfloat16 to halve output HBM traffic
    (recommended on v6e); default f32 matches the PyTorch module's output dtype.
    """
    x2 = x.reshape((-1, IN_DIM))
    if x2.dtype != jnp.bfloat16:
        x2 = x2.astype(jnp.float32)
    B = x2.shape[0]
    batch_tile, num_tiles = _choose_tiling(B, max_batch_tile)

    return pl.pallas_call(
        mlp_kernel,
        out_shape=jax.ShapeDtypeStruct((B, OUT_DIM), out_dtype),
        grid_spec=pltpu.PrefetchScalarGridSpec(
            num_scalar_prefetch=0,
            grid=(num_tiles,),
            in_specs=[
                # activations: tiled along the batch (M) axis
                pl.BlockSpec((batch_tile, IN_DIM), lambda i: (i, 0)),
                # weights / biases: constant index_map -> DMA'd once, stay resident
                pl.BlockSpec((IN_DIM, HID), lambda i: (0, 0)),    # W1^T * bn_scale (bf16)
                pl.BlockSpec((1, HID), lambda i: (0, 0)),         # folded bias (f32)
                pl.BlockSpec((HID, OUT_PAD), lambda i: (0, 0)),   # W2^T, zero-padded (bf16)
                pl.BlockSpec((1, OUT_PAD), lambda i: (0, 0)),     # b2, zero-padded (f32)
            ],
            out_specs=pl.BlockSpec((batch_tile, OUT_DIM), lambda i: (i, 0)),
        ),
        compiler_params=pltpu.CompilerParams(
            dimension_semantics=("parallel",),      # M axis shards across TCs on v7x
            vmem_limit_bytes=64 * 1024 * 1024,      # explicit headroom for 2048-row tiles
        ),
    )(x2, w1_eff, b_eff, w2_t, b2)


def init_params(key):
    """Deterministic params mirroring PyTorch default shapes/scales, with eval-mode
    BatchNorm folded into layer1 and lane-aligned zero padding of the output side
    applied once here.  (Note: folding bn_scale before the bf16 cast matches the
    in-file reference; for strict f32-PyTorch parity keep bn_scale as a separate
    f32 row-vector multiply in the epilogue instead.)"""
    k1, k2, k3, k4, k5, k6, k7, k8 = jax.random.split(key, 8)

    # Linear(273, 1024): weight (1024, 273), bias (1024,), U(-1/sqrt(273), 1/sqrt(273))
    bound1 = 1.0 / jnp.sqrt(jnp.float32(IN_DIM))
    w1 = jax.random.uniform(k1, (HID, IN_DIM), jnp.float32, -bound1, bound1)
    b1 = jax.random.uniform(k2, (HID,), jnp.float32, -bound1, bound1)

    # BatchNorm1d(1024) eval-mode stats
    gamma = 1.0 + 0.1 * jax.random.normal(k3, (HID,), jnp.float32)
    beta = 0.1 * jax.random.normal(k4, (HID,), jnp.float32)
    running_mean = 0.05 * jax.random.normal(k5, (HID,), jnp.float32)
    running_var = 1.0 + 0.1 * jax.random.uniform(k6, (HID,), jnp.float32)

    # Linear(1024, 346)
    bound2 = 1.0 / jnp.sqrt(jnp.float32(HID))
    w2 = jax.random.uniform(k7, (OUT_DIM, HID), jnp.float32, -bound2, bound2)
    b2 = jax.random.uniform(k8, (OUT_DIM,), jnp.float32, -bound2, bound2)

    # Fold BN (eval) + layer1 bias:  bn(x@W1^T + b1) = x @ (W1^T*scale) + (b1*scale+shift)
    inv_std = 1.0 / jnp.sqrt(running_var + BN_EPS)
    bn_scale = gamma * inv_std
    bn_shift = beta - running_mean * bn_scale

    w1_eff = w1.T * bn_scale[None, :]                      # (273, 1024) f32
    b_eff = (b1 * bn_scale + bn_shift).reshape(1, HID)     # (1, 1024)  f32

    # Output-side lane alignment (zero padding) + bf16 cast of matmul operands.
    w2_t_pad = jnp.zeros((HID, OUT_PAD), jnp.float32).at[:, :OUT_DIM].set(w2.T)
    b2_pad = jnp.zeros((1, OUT_PAD), jnp.float32).at[0, :OUT_DIM].set(b2)

    return dict(
        w1_eff=w1_eff.astype(jnp.bfloat16),       # (273, 1024) bf16
        b_eff=b_eff,                              # (1, 1024)   f32
        w2_t=w2_t_pad.astype(jnp.bfloat16),       # (1024, 384) bf16
        b2=b2_pad,                                # (1, 384)    f32
    )


def mlp_reference(x, p):
    """Pure-JAX reference using the same bf16-rounded operands (semantics check)."""
    x2 = x.reshape((-1, IN_DIM)).astype(jnp.float32)
    xb = x2.astype(jnp.bfloat16).astype(jnp.float32)
    w1 = p["w1_eff"].astype(jnp.float32)
    h = xb @ w1 + p["b_eff"]
    h = jnp.maximum(h, 0.0)
    hb = h.astype(jnp.bfloat16).astype(jnp.float32)
    w2 = p["w2_t"].astype(jnp.float32)[:, :OUT_DIM]
    return hb @ w2 + p["b2"][:, :OUT_DIM]


if __name__ == "__main__":
    key = jax.random.PRNGKey(0)
    pkey, xkey = jax.random.split(key)
    params = init_params(pkey)

    # Small example input: batch of 8 frames, each (1 + 2*CONTEXT)=21 rows of 13 MFCCs.
    x = jax.random.normal(xkey, (8, 1 + 2 * CONTEXT, 13), jnp.float32)

    out = mlp_forward(
        x,
        params["w1_eff"], params["b_eff"],
        params["w2_t"], params["b2"],
    )
    out = jax.block_until_ready(out)

    ref = mlp_reference(x, params)
    assert out.shape == (8, OUT_DIM), out.shape
    assert jnp.allclose(out, ref, atol=1e-2, rtol=1e-2), "mismatch vs pure-JAX reference"

    print("KERNEL_OK")
</pallas_src>

<mosaic_0001>
module attributes {stable_mosaic.version = 11 : i64} {
  func.func @mlp_kernel(%arg0: i32, %arg1: memref<8x273xf32, #tpu.memory_space<vmem>>, %arg2: memref<273x1024xbf16, #tpu.memory_space<vmem>>, %arg3: memref<1x1024xf32, #tpu.memory_space<vmem>>, %arg4: memref<1024x384xbf16, #tpu.memory_space<vmem>>, %arg5: memref<1x384xf32, #tpu.memory_space<vmem>>, %arg6: memref<8x346xf32, #tpu.memory_space<vmem>>) attributes {dimension_semantics = [#tpu.dimension_semantics<parallel>], iteration_bounds = array<i64: 1>, scalar_prefetch = 0 : i64, scratch_operands = 0 : i64, tpu.core_type = #tpu.core_type<tc>, window_params = [{transform_indices = @transform_0, window_bounds = array<i64: 8, 273>}, {pipeline_mode = #tpu.pipeline_mode<synchronous>, transform_indices = @transform_1, window_bounds = array<i64: 273, 1024>}, {pipeline_mode = #tpu.pipeline_mode<synchronous>, transform_indices = @transform_2, window_bounds = array<i64: 1, 1024>}, {pipeline_mode = #tpu.pipeline_mode<synchronous>, transform_indices = @transform_3, window_bounds = array<i64: 1024, 384>}, {pipeline_mode = #tpu.pipeline_mode<synchronous>, transform_indices = @transform_4, window_bounds = array<i64: 1, 384>}, {transform_indices = @transform_5, window_bounds = array<i64: 8, 346>}]} {
    %c0 = arith.constant 0 : index
    %c0_0 = arith.constant 0 : index
    %0 = vector.load %arg1[%c0, %c0_0] : memref<8x273xf32, #tpu.memory_space<vmem>>, vector<8x273xf32>
    %1 = arith.truncf %0 : vector<8x273xf32> to vector<8x273xbf16>
    %c0_1 = arith.constant 0 : index
    %c0_2 = arith.constant 0 : index
    %2 = vector.load %arg2[%c0_1, %c0_2] : memref<273x1024xbf16, #tpu.memory_space<vmem>>, vector<273x1024xbf16>
    %cst = arith.constant dense<0.000000e+00> : vector<8x1024xf32>
    %3 = tpu.matmul %1, %2, %cst {dimension_numbers = #tpu.dot_dimension_numbers<[1], [0], [0], [1], [0, 0, 1, 1], [], []>} : vector<8x273xbf16>, vector<273x1024xbf16>, vector<8x1024xf32> -> vector<8x1024xf32>
    %c0_3 = arith.constant 0 : index
    %c0_4 = arith.constant 0 : index
    %4 = vector.load %arg3[%c0_3, %c0_4] : memref<1x1024xf32, #tpu.memory_space<vmem>>, vector<1x1024xf32>
    %5 = vector.broadcast %4 : vector<1x1024xf32> to vector<8x1024xf32>
    %6 = arith.addf %3, %5 : vector<8x1024xf32>
    %cst_5 = arith.constant 0.000000e+00 : f32
    %7 = vector.broadcast %cst_5 : f32 to vector<8x1024xf32>
    %8 = arith.maximumf %6, %7 : vector<8x1024xf32>
    %9 = arith.truncf %8 : vector<8x1024xf32> to vector<8x1024xbf16>
    %c0_6 = arith.constant 0 : index
    %c0_7 = arith.constant 0 : index
    %10 = vector.load %arg4[%c0_6, %c0_7] : memref<1024x384xbf16, #tpu.memory_space<vmem>>, vector<1024x384xbf16>
    %cst_8 = arith.constant dense<0.000000e+00> : vector<8x384xf32>
    %11 = tpu.matmul %9, %10, %cst_8 {dimension_numbers = #tpu.dot_dimension_numbers<[1], [0], [0], [1], [0, 0, 1, 1], [], []>} : vector<8x1024xbf16>, vector<1024x384xbf16>, vector<8x384xf32> -> vector<8x384xf32>
    %c0_9 = arith.constant 0 : index
    %c0_10 = arith.constant 0 : index
    %12 = vector.load %arg5[%c0_9, %c0_10] : memref<1x384xf32, #tpu.memory_space<vmem>>, vector<1x384xf32>
    %13 = vector.broadcast %12 : vector<1x384xf32> to vector<8x384xf32>
    %14 = arith.addf %11, %13 : vector<8x384xf32>
    %15 = vector.extract_strided_slice %14 {offsets = [0, 0], sizes = [8, 346], strides = [1, 1]} : vector<8x384xf32> to vector<8x346xf32>
    %c0_11 = arith.constant 0 : index
    %c0_12 = arith.constant 0 : index
    %16 = vector.load %arg6[%c0_11, %c0_12] : memref<8x346xf32, #tpu.memory_space<vmem>>, vector<8x346xf32>
    tpu.vector_store %arg6[%c0_11, %c0_12], %15 {strides = array<i32>} : memref<8x346xf32, #tpu.memory_space<vmem>>, vector<8x346xf32>,
    return
  }
  func.func @transform_0(%arg0: i32) -> (i32, i32) {
    %c0_i32 = arith.constant 0 : i32
    %c0_i32_0 = arith.constant 0 : i32
    return %arg0, %c0_i32 : i32, i32
  }
  func.func @transform_1(%arg0: i32) -> (i32, i32) {
    %c0_i32 = arith.constant 0 : i32
    %c0_i32_0 = arith.constant 0 : i32
    %c0_i32_1 = arith.constant 0 : i32
    return %c0_i32, %c0_i32_0 : i32, i32
  }
  func.func @transform_2(%arg0: i32) -> (i32, i32) {
    %c0_i32 = arith.constant 0 : i32
    %c0_i32_0 = arith.constant 0 : i32
    %c0_i32_1 = arith.constant 0 : i32
    return %c0_i32, %c0_i32_0 : i32, i32
  }
  func.func @transform_3(%arg0: i32) -> (i32, i32) {
    %c0_i32 = arith.constant 0 : i32
    %c0_i32_0 = arith.constant 0 : i32
    %c0_i32_1 = arith.constant 0 : i32
    return %c0_i32, %c0_i32_0 : i32, i32
  }
  func.func @transform_4(%arg0: i32) -> (i32, i32) {
    %c0_i32 = arith.constant 0 : i32
    %c0_i32_0 = arith.constant 0 : i32
    %c0_i32_1 = arith.constant 0 : i32
    return %c0_i32, %c0_i32_0 : i32, i32
  }
  func.func @transform_5(%arg0: i32) -> (i32, i32) {
    %c0_i32 = arith.constant 0 : i32
    %c0_i32_0 = arith.constant 0 : i32
    return %arg0, %c0_i32 : i32, i32
  }
}

</mosaic_0001>

<llo_original>
// kernel: tpu_custom_call.1
$region0: #{tpu_custom_call.1}
  #allocation0 [shape = 'u32[]', space=smem, size = 0x4, offset = 0x4, fixed_abs, tag = 'smem constant byte address 0x4 - core index']
  #allocation1 [shape = 'u32[144,128]{1,0:T(1,128)}', space=vmem, size = 0x12000, scoped, tag = 'internal scratch']
  %s0 = inlined_call_operand.hbm [shape: f32[8,273], index: 0, kind: input, shape index: {}]
  %s1 = inlined_call_operand.hbm [shape: bf16[273,1024], index: 1, kind: input, shape index: {}]
  %s2 = inlined_call_operand.hbm [shape: f32[1,1024], index: 2, kind: input, shape index: {}]
  %s3 = inlined_call_operand.hbm [shape: bf16[1024,384], index: 3, kind: input, shape index: {}]
  %s4 = inlined_call_operand.hbm [shape: f32[1,384], index: 4, kind: input, shape index: {}]
  %s5 = inlined_call_operand.hbm [shape: f32[8,346], index: 5, kind: output, shape index: {}]
  %s6 = sld [smem:[#allocation0]]
  $region50: #{tpu_custom_call.1} parent=0
    _
  %s8 = ssub.s32 1, %s6
  %s9 = scalar_select 0, %s8, %s6
  $region1: #{tpu_custom_call.1} parent=0
    #allocation2 [shape = 'u8[12288]{0}', space=vmem, size = 0x3000, scoped, tag = 'input window, operand 0, single buffered']
    #allocation3 [shape = 's32[1]{0}', space=sflag, size = 0x4, scoped, tag = 'scoped memory for tpu_custom_call.1']
    #allocation4 [shape = 's32[1]{0}', space=sflag, size = 0x4, scoped, tag = 'scoped memory for tpu_custom_call.1']
    #allocation5 [shape = 'u8[573440]{0}', space=vmem, size = 0x8c000, scoped, tag = 'input window, operand 1, single buffered']
    #allocation6 [shape = 's32[1]{0}', space=sflag, size = 0x4, scoped, tag = 'scoped memory for tpu_custom_call.1']
    #allocation7 [shape = 'u8[4096]{0}', space=vmem, size = 0x1000, scoped, tag = 'input window, operand 2, single buffered']
    #allocation8 [shape = 'u8[786432]{0}', space=vmem, size = 0xc0000, scoped, tag = 'input window, operand 3, single buffered']
    #allocation9 [shape = 's32[1]{0}', space=sflag, size = 0x4, scoped, tag = 'scoped memory for tpu_custom_call.1']
    #allocation10 [shape = 'u8[1536]{0}', space=vmem, size = 0x800, scoped, tag = 'input window, operand 4, single buffered']
    #allocation11 [shape = 'u8[12288]{0}', space=vmem, size = 0x3000, scoped, tag = 'output window, operand 0, single buffered']
    %10 = vsyncpa [#allocation3], 0
    %11 = vsyncpa [#allocation6], 0
    %12 = vsyncpa [#allocation9], 0
    %13 = vsyncpa [#allocation4], 0
    // Predicated region
    $region2: #{tpu_custom_call.1} parent=1 // pred_check
      _
    $region3: #{tpu_custom_call.1} parent=1 // pred_check_branch
      %15 = sbr.rel (0) target = $region5
    $region4: #{tpu_custom_call.1} parent=1 // pred_region
      %s17 = ssub.s32 384, 384
      %18 = vsyncadd [#allocation3], %s17
      %s20 = sshll.u32 [#allocation2], 4
      %s21 = int_to_ptr.vmem [resolvable:$true] %s20
      %23 = dma.hbm_to_vmem [thread:$0]  %s0, 384, %s21, [#allocation3]
    $region5: #{tpu_custom_call.1} parent=1 // pred_fallthru
      _
    // Predicated region
    $region6: #{tpu_custom_call.1} parent=1 // pred_check
      _
    $region7: #{tpu_custom_call.1} parent=1 // pred_check_branch
      %25 = sbr.rel (0) target = $region9
    $region8: #{tpu_custom_call.1} parent=1 // pred_region
      %s27 = ssub.s32 17920, 17920
      %28 = vsyncadd [#allocation6], %s27
      %s29 = sshll.u32 [#allocation5], 4
      %s30 = int_to_ptr.vmem [resolvable:$true] %s29
      %35 = dma.hbm_to_vmem [thread:$0]  %s1, 17920, %s30, [#allocation6], 512, 512, 32
    $region9: #{tpu_custom_call.1} parent=1 // pred_fallthru
      _
    // Predicated region
    $region10: #{tpu_custom_call.1} parent=1 // pred_check
      _
    $region11: #{tpu_custom_call.1} parent=1 // pred_check_branch
      %37 = sbr.rel (0) target = $region13
    $region12: #{tpu_custom_call.1} parent=1 // pred_region
      %s39 = ssub.s32 128, 128
      %40 = vsyncadd [#allocation6], %s39
      %s42 = sshll.u32 [#allocation7], 4
      %s43 = int_to_ptr.vmem [resolvable:$true] %s42
      %45 = dma.hbm_to_vmem [thread:$0]  %s2, 128, %s43, [#allocation6]
    $region13: #{tpu_custom_call.1} parent=1 // pred_fallthru
      _
    // Predicated region
    $region14: #{tpu_custom_call.1} parent=1 // pred_check
      _
    $region15: #{tpu_custom_call.1} parent=1 // pred_check_branch
      %47 = sbr.rel (0) target = $region17
    $region16: #{tpu_custom_call.1} parent=1 // pred_region
      %s49 = ssub.s32 24576, 24576
      %50 = vsyncadd [#allocation9], %s49
      %s51 = sshll.u32 [#allocation8], 4
      %s52 = int_to_ptr.vmem [resolvable:$true] %s51
      %57 = dma.hbm_to_vmem [thread:$0]  %s3, 24576, %s52, [#allocation9], 192, 192, 12
    $region17: #{tpu_custom_call.1} parent=1 // pred_fallthru
      _
    // Predicated region
    $region18: #{tpu_custom_call.1} parent=1 // pred_check
      _
    $region19: #{tpu_custom_call.1} parent=1 // pred_check_branch
      %59 = sbr.rel (0) target = $region21
    $region20: #{tpu_custom_call.1} parent=1 // pred_region
      %s61 = ssub.s32 48, 48
      %62 = vsyncadd [#allocation9], %s61
      %s64 = sshll.u32 [#allocation10], 4
      %s65 = int_to_ptr.vmem [resolvable:$true] %s64
      %67 = dma.hbm_to_vmem [thread:$0]  %s4, 48, %s65, [#allocation9]
    $region21: #{tpu_custom_call.1} parent=1 // pred_fallthru
      _
    // Predicated region
    $region22: #{tpu_custom_call.1} parent=1 // pred_check
      _
    $region23: #{tpu_custom_call.1} parent=1 // pred_check_branch
      %69 = sbr.rel (0) target = $region25
    $region24: #{tpu_custom_call.1} parent=1 // pred_region
      %70 = dma.done [#allocation3], 384
    $region25: #{tpu_custom_call.1} parent=1 // pred_fallthru
      _
    // Predicated region
    $region26: #{tpu_custom_call.1} parent=1 // pred_check
      _
    $region27: #{tpu_custom_call.1} parent=1 // pred_check_branch
      %72 = sbr.rel (0) target = $region29
    $region28: #{tpu_custom_call.1} parent=1 // pred_region
      %73 = dma.done [#allocation6], 17920
    $region29: #{tpu_custom_call.1} parent=1 // pred_fallthru
      _
    // Predicated region
    $region30: #{tpu_custom_call.1} parent=1 // pred_check
      _
    $region31: #{tpu_custom_call.1} parent=1 // pred_check_branch
      %75 = sbr.rel (0) target = $region33
    $region32: #{tpu_custom_call.1} parent=1 // pred_region
      %76 = dma.done [#allocation6], 128
    $region33: #{tpu_custom_call.1} parent=1 // pred_fallthru
      _
    // Predicated region
    $region34: #{tpu_custom_call.1} parent=1 // pred_check
      _
    $region35: #{tpu_custom_call.1} parent=1 // pred_check_branch
      %78 = sbr.rel (0) target = $region37
    $region36: #{tpu_custom_call.1} parent=1 // pred_region
      %79 = dma.done [#allocation9], 24576
    $region37: #{tpu_custom_call.1} parent=1 // pred_fallthru
      _
    // Predicated region
    $region38: #{tpu_custom_call.1} parent=1 // pred_check
      _
    $region39: #{tpu_custom_call.1} parent=1 // pred_check_branch
      %81 = sbr.rel (0) target = $region41
    $region40: #{tpu_custom_call.1} parent=1 // pred_region
      %82 = dma.done [#allocation9], 48
    $region41: #{tpu_custom_call.1} parent=1 // pred_fallthru
      _
    %v84 = vld [vmem:[#allocation2] sm:$0xff]
    %v85 = vld [vmem:[#allocation2 + $0x8] sm:$0xff]
    %v86 = vld [vmem:[#allocation2 + $0x10] sm:$0xff]
    %v87 = vpack.c.bf16 %v84, %v84
    %v88 = vpack.c.bf16 %v85, %v85
    %v89 = vpack.c.bf16 %v86, %v86
    %v90 = vld [vmem:[#allocation5] sm:$0xff]
    %v91 = vld [vmem:[#allocation5 + $0x8] sm:$0xff]
    %v92 = vld [vmem:[#allocation5 + $0x10] sm:$0xff]
    %v93 = vld [vmem:[#allocation5 + $0x18] sm:$0xff]
    %v94 = vld [vmem:[#allocation5 + $0x20] sm:$0xff]
    %v95 = vld [vmem:[#allocation5 + $0x28] sm:$0xff]
    %v96 = vld [vmem:[#allocation5 + $0x30] sm:$0xff]
    %v97 = vld [vmem:[#allocation5 + $0x38] sm:$0xff]
    %v98 = vld [vmem:[#allocation5 + $0x40] sm:$0xff]
    %v99 = vld [vmem:[#allocation5 + $0x48] sm:$0xff]
    %v100 = vld [vmem:[#allocation5 + $0x50] sm:$0xff]
    %v101 = vld [vmem:[#allocation5 + $0x58] sm:$0xff]
    %v102 = vld [vmem:[#allocation5 + $0x60] sm:$0xff]
    %v103 = vld [vmem:[#allocation5 + $0x68] sm:$0xff]
    %v104 = vld [vmem:[#allocation5 + $0x70] sm:$0xff]
    %v105 = vld [vmem:[#allocation5 + $0x78] sm:$0xff]
    %v106 = vld [vmem:[#allocation5 + $0x80] sm:$0xff]
    %v107 = vld [vmem:[#allocation5 + $0x88] sm:$0xff]
    %v108 = vld [vmem:[#allocation5 + $0x90] sm:$0xff]
    %v109 = vld [vmem:[#allocation5 + $0x98] sm:$0xff]
    %v110 = vld [vmem:[#allocation5 + $0xa0] sm:$0xff]
    %v111 = vld [vmem:[#allocation5 + $0xa8] sm:$0xff]
    %v112 = vld [vmem:[#allocation5 + $0xb0] sm:$0xff]
    %v113 = vld [vmem:[#allocation5 + $0xb8] sm:$0xff]
    %v114 = vld [vmem:[#allocation5 + $0xc0] sm:$0xff]
    %v115 = vld [vmem:[#allocation5 + $0xc8] sm:$0xff]
    %v116 = vld [vmem:[#allocation5 + $0xd0] sm:$0xff]
    %v117 = vld [vmem:[#allocation5 + $0xd8] sm:$0xff]
    %v118 = vld [vmem:[#allocation5 + $0xe0] sm:$0xff]
    %v119 = vld [vmem:[#allocation5 + $0xe8] sm:$0xff]
    %v120 = vld [vmem:[#allocation5 + $0xf0] sm:$0xff]
    %v121 = vld [vmem:[#allocation5 + $0xf8] sm:$0xff]
    %v122 = vld [vmem:[#allocation5 + $0x100] sm:$0xff]
    %v123 = vld [vmem:[#allocation5 + $0x108] sm:$0xff]
    %v124 = vld [vmem:[#allocation5 + $0x110] sm:$0xff]
    %v125 = vld [vmem:[#allocation5 + $0x118] sm:$0xff]
    %v126 = vld [vmem:[#allocation5 + $0x120] sm:$0xff]
    %v127 = vld [vmem:[#allocation5 + $0x128] sm:$0xff]
    %v128 = vld [vmem:[#allocation5 + $0x130] sm:$0xff]
    %v129 = vld [vmem:[#allocation5 + $0x138] sm:$0xff]
    %v130 = vld [vmem:[#allocation5 + $0x140] sm:$0xff]
    %v131 = vld [vmem:[#allocation5 + $0x148] sm:$0xff]
    %v132 = vld [vmem:[#allocation5 + $0x150] sm:$0xff]
    %v133 = vld [vmem:[#allocation5 + $0x158] sm:$0xff]
    %v134 = vld [vmem:[#allocation5 + $0x160] sm:$0xff]
    %v135 = vld [vmem:[#allocation5 + $0x168] sm:$0xff]
    %v136 = vld [vmem:[#allocation5 + $0x170] sm:$0xff]
    %v137 = vld [vmem:[#allocation5 + $0x178] sm:$0xff]
    %v138 = vld [vmem:[#allocation5 + $0x180] sm:$0xff]
    %v139 = vld [vmem:[#allocation5 + $0x188] sm:$0xff]
    %v140 = vld [vmem:[#allocation5 + $0x190] sm:$0xff]
    %v141 = vld [vmem:[#allocation5 + $0x198] sm:$0xff]
    %v142 = vld [vmem:[#allocation5 + $0x1a0] sm:$0xff]
    %v143 = vld [vmem:[#allocation5 + $0x1a8] sm:$0xff]
    %v144 = vld [vmem:[#allocation5 + $0x1b0] sm:$0xff]
    %v145 = vld [vmem:[#allocation5 + $0x1b8] sm:$0xff]
    %v146 = vld [vmem:[#allocation5 + $0x1c0] sm:$0xff]
    %v147 = vld [vmem:[#allocation5 + $0x1c8] sm:$0xff]
    %v148 = vld [vmem:[#allocation5 + $0x1d0] sm:$0xff]
    %v149 = vld [vmem:[#allocation5 + $0x1d8] sm:$0xff]
    %v150 = vld [vmem:[#allocation5 + $0x1e0] sm:$0xff]
    %v151 = vld [vmem:[#allocation5 + $0x1e8] sm:$0xff]
    %v152 = vld [vmem:[#allocation5 + $0x1f0] sm:$0xff]
    %v153 = vld [vmem:[#allocation5 + $0x1f8] sm:$0xff]
    %v154 = vld [vmem:[#allocation5 + $0x200] sm:$0xff]
    %v155 = vld [vmem:[#allocation5 + $0x208] sm:$0xff]
    %v156 = vld [vmem:[#allocation5 + $0x210] sm:$0xff]
    %v157 = vld [vmem:[#allocation5 + $0x218] sm:$0xff]
    %v158 = vld [vmem:[#allocation5 + $0x220] sm:$0xff]
    %v159 = vld [vmem:[#allocation5 + $0x228] sm:$0xff]
    %v160 = vld [vmem:[#allocation5 + $0x230] sm:$0xff]
    %v161 = vld [vmem:[#allocation5 + $0x238] sm:$0xff]
    %v162 = vld [vmem:[#allocation5 + $0x240] sm:$0xff]
    %v163 = vld [vmem:[#allocation5 + $0x248] sm:$0xff]
    %v164 = vld [vmem:[#allocation5 + $0x250] sm:$0xff]
    %v165 = vld [vmem:[#allocation5 + $0x258] sm:$0xff]
    %v166 = vld [vmem:[#allocation5 + $0x260] sm:$0xff]
    %v167 = vld [vmem:[#allocation5 + $0x268] sm:$0xff]
    %v168 = vld [vmem:[#allocation5 + $0x270] sm:$0xff]
    %v169 = vld [vmem:[#allocation5 + $0x278] sm:$0xff]
    %v170 = vld [vmem:[#allocation5 + $0x280] sm:$0xff]
    %v171 = vld [vmem:[#allocation5 + $0x288] sm:$0xff]
    %v172 = vld [vmem:[#allocation5 + $0x290] sm:$0xff]
    %v173 = vld [vmem:[#allocation5 + $0x298] sm:$0xff]
    %v174 = vld [vmem:[#allocation5 + $0x2a0] sm:$0xff]
    %v175 = vld [vmem:[#allocation5 + $0x2a8] sm:$0xff]
    %v176 = vld [vmem:[#allocation5 + $0x2b0] sm:$0xff]
    %v177 = vld [vmem:[#allocation5 + $0x2b8] sm:$0xff]
    %v178 = vld [vmem:[#allocation5 + $0x2c0] sm:$0xff]
    %v179 = vld [vmem:[#allocation5 + $0x2c8] sm:$0xff]
    %v180 = vld [vmem:[#allocation5 + $0x2d0] sm:$0xff]
    %v181 = vld [vmem:[#allocation5 + $0x2d8] sm:$0xff]
    %v182 = vld [vmem:[#allocation5 + $0x2e0] sm:$0xff]
    %v183 = vld [vmem:[#allocation5 + $0x2e8] sm:$0xff]
    %v184 = vld [vmem:[#allocation5 + $0x2f0] sm:$0xff]
    %v185 = vld [vmem:[#allocation5 + $0x2f8] sm:$0xff]
    %v186 = vld [vmem:[#allocation5 + $0x300] sm:$0xff]
    %v187 = vld [vmem:[#allocation5 + $0x308] sm:$0xff]
    %v188 = vld [vmem:[#allocation5 + $0x310] sm:$0xff]
    %v189 = vld [vmem:[#allocation5 + $0x318] sm:$0xff]
    %v190 = vld [vmem:[#allocation5 + $0x320] sm:$0xff]
    %v191 = vld [vmem:[#allocation5 + $0x328] sm:$0xff]
    %v192 = vld [vmem:[#allocation5 + $0x330] sm:$0xff]
    %v193 = vld [vmem:[#allocation5 + $0x338] sm:$0xff]
    %v194 = vld [vmem:[#allocation5 + $0x340] sm:$0xff]
    %v195 = vld [vmem:[#allocation5 + $0x348] sm:$0xff]
    %v196 = vld [vmem:[#allocation5 + $0x350] sm:$0xff]
    %v197 = vld [vmem:[#allocation5 + $0x358] sm:$0xff]
    %v198 = vld [vmem:[#allocation5 + $0x360] sm:$0xff]
    %v199 = vld [vmem:[#allocation5 + $0x368] sm:$0xff]
    %v200 = vld [vmem:[#allocation5 + $0x370] sm:$0xff]
    %v201 = vld [vmem:[#allocation5 + $0x378] sm:$0xff]
    %v202 = vld [vmem:[#allocation5 + $0x380] sm:$0xff]
    %v203 = vld [vmem:[#allocation5 + $0x388] sm:$0xff]
    %v204 = vld [vmem:[#allocation5 + $0x390] sm:$0xff]
    %v205 = vld [vmem:[#allocation5 + $0x398] sm:$0xff]
    %v206 = vld [vmem:[#allocation5 + $0x3a0] sm:$0xff]
    %v207 = vld [vmem:[#allocation5 + $0x3a8] sm:$0xff]
    %v208 = vld [vmem:[#allocation5 + $0x3b0] sm:$0xff]
    %v209 = vld [vmem:[#allocation5 + $0x3b8] sm:$0xff]
    %v210 = vld [vmem:[#allocation5 + $0x3c0] sm:$0xff]
    %v211 = vld [vmem:[#allocation5 + $0x3c8] sm:$0xff]
    %v212 = vld [vmem:[#allocation5 + $0x3d0] sm:$0xff]
    %v213 = vld [vmem:[#allocation5 + $0x3d8] sm:$0xff]
    %v214 = vld [vmem:[#allocation5 + $0x3e0] sm:$0xff]
    %v215 = vld [vmem:[#allocation5 + $0x3e8] sm:$0xff]
    %v216 = vld [vmem:[#allocation5 + $0x3f0] sm:$0xff]
    %v217 = vld [vmem:[#allocation5 + $0x3f8] sm:$0xff]
    %v218 = vld [vmem:[#allocation5 + $0x400] sm:$0xff]
    %v219 = vld [vmem:[#allocation5 + $0x408] sm:$0xff]
    %v220 = vld [vmem:[#allocation5 + $0x410] sm:$0xff]
    %v221 = vld [vmem:[#allocation5 + $0x418] sm:$0xff]
    %v222 = vld [vmem:[#allocation5 + $0x420] sm:$0xff]
    %v223 = vld [vmem:[#allocation5 + $0x428] sm:$0xff]
    %v224 = vld [vmem:[#allocation5 + $0x430] sm:$0xff]
    %v225 = vld [vmem:[#allocation5 + $0x438] sm:$0xff]
    %v226 = vld [vmem:[#allocation5 + $0x440] sm:$0x11]
    %v227 = vld [vmem:[#allocation5 + $0x448] sm:$0x11]
    %v228 = vld [vmem:[#allocation5 + $0x450] sm:$0x11]
    %v229 = vld [vmem:[#allocation5 + $0x458] sm:$0x11]
    %v230 = vld [vmem:[#allocation7] sm:$0xff]
    %v232 = vlaneseq
    %v233 = vshrl.u32 %v232, 7
    %v234 = vsub.s32 0, %v233
    %v235 = vrot.slane %v230, %v234
    %v236 = vlaneseq
    %v237 = vshrl.u32 %v236, 7
    %v238 = vsub.s32 1, %v237
    %v239 = vrot.slane %v230, %v238
    %v240 = vlaneseq
    %v241 = vshrl.u32 %v240, 7
    %v242 = vsub.s32 2, %v241
    %v243 = vrot.slane %v230, %v242
    %v244 = vlaneseq
    %v245 = vshrl.u32 %v244, 7
    %v246 = vsub.s32 3, %v245
    %v247 = vrot.slane %v230, %v246
    %v248 = vlaneseq
    %v249 = vshrl.u32 %v248, 7
    %v250 = vsub.s32 4, %v249
    %v251 = vrot.slane %v230, %v250
    %v252 = vlaneseq
    %v253 = vshrl.u32 %v252, 7
    %v254 = vsub.s32 5, %v253
    %v255 = vrot.slane %v230, %v254
    %v256 = vlaneseq
    %v257 = vshrl.u32 %v256, 7
    %v258 = vsub.s32 6, %v257
    %v259 = vrot.slane %v230, %v258
    %v260 = vlaneseq
    %v261 = vshrl.u32 %v260, 7
    %v262 = vsub.s32 7, %v261
    %v263 = vrot.slane %v230, %v262
    %v412 = vunpack.c.l.b16 %v90
    %v413 = vunpack.c.h.b16 %v90
    %v414 = vunpack.c.l.b16 %v91
    %v415 = vunpack.c.h.b16 %v91
    %v416 = vunpack.c.l.b16 %v92
    %v417 = vunpack.c.h.b16 %v92
    %v418 = vunpack.c.l.b16 %v93
    %v419 = vunpack.c.h.b16 %v93
    %v420 = vunpack.c.l.b16 %v94
    %v421 = vunpack.c.h.b16 %v94
    %v422 = vunpack.c.l.b16 %v95
    %v423 = vunpack.c.h.b16 %v95
    %v424 = vunpack.c.l.b16 %v96
    %v425 = vunpack.c.h.b16 %v96
    %v426 = vunpack.c.l.b16 %v97
    %v427 = vunpack.c.h.b16 %v97
    %v428 = vunpack.c.l.b16 %v98
    %v429 = vunpack.c.h.b16 %v98
    %v430 = vunpack.c.l.b16 %v99
    %v431 = vunpack.c.h.b16 %v99
    %v432 = vunpack.c.l.b16 %v100
    %v433 = vunpack.c.h.b16 %v100
    %v434 = vunpack.c.l.b16 %v101
    %v435 = vunpack.c.h.b16 %v101
    %v436 = vunpack.c.l.b16 %v102
    %v437 = vunpack.c.h.b16 %v102
    %v438 = vunpack.c.l.b16 %v103
    %v439 = vunpack.c.h.b16 %v103
    %v440 = vunpack.c.l.b16 %v104
    %v441 = vunpack.c.h.b16 %v104
    %v442 = vunpack.c.l.b16 %v105
    %v443 = vunpack.c.h.b16 %v105
    %v444 = vunpack.c.l.b16 %v106
    %v445 = vunpack.c.h.b16 %v106
    %v446 = vunpack.c.l.b16 %v107
    %v447 = vunpack.c.h.b16 %v107
    %v448 = vunpack.c.l.b16 %v108
    %v449 = vunpack.c.h.b16 %v108
    %v450 = vunpack.c.l.b16 %v109
    %v451 = vunpack.c.h.b16 %v109
    %v452 = vunpack.c.l.b16 %v110
    %v453 = vunpack.c.h.b16 %v110
    %v454 = vunpack.c.l.b16 %v111
    %v455 = vunpack.c.h.b16 %v111
    %v456 = vunpack.c.l.b16 %v112
    %v457 = vunpack.c.h.b16 %v112
    %v458 = vunpack.c.l.b16 %v113
    %v459 = vunpack.c.h.b16 %v113
    %v460 = vunpack.c.l.b16 %v114
    %v461 = vunpack.c.h.b16 %v114
    %v462 = vunpack.c.l.b16 %v115
    %v463 = vunpack.c.h.b16 %v115
    %v464 = vunpack.c.l.b16 %v116
    %v465 = vunpack.c.h.b16 %v116
    %v466 = vunpack.c.l.b16 %v117
    %v467 = vunpack.c.h.b16 %v117
    %v468 = vunpack.c.l.b16 %v118
    %v469 = vunpack.c.h.b16 %v118
    %v470 = vunpack.c.l.b16 %v119
    %v471 = vunpack.c.h.b16 %v119
    %v472 = vunpack.c.l.b16 %v120
    %v473 = vunpack.c.h.b16 %v120
    %v474 = vunpack.c.l.b16 %v121
    %v475 = vunpack.c.h.b16 %v121
    %v476 = vunpack.c.l.b16 %v122
    %v477 = vunpack.c.h.b16 %v122
    %v478 = vunpack.c.l.b16 %v123
    %v479 = vunpack.c.h.b16 %v123
    %v480 = vunpack.c.l.b16 %v124
    %v481 = vunpack.c.h.b16 %v124
    %v482 = vunpack.c.l.b16 %v125
    %v483 = vunpack.c.h.b16 %v125
    %v484 = vunpack.c.l.b16 %v126
    %v485 = vunpack.c.h.b16 %v126
    %v486 = vunpack.c.l.b16 %v127
    %v487 = vunpack.c.h.b16 %v127
    %v488 = vunpack.c.l.b16 %v128
    %v489 = vunpack.c.h.b16 %v128
    %v490 = vunpack.c.l.b16 %v129
    %v491 = vunpack.c.h.b16 %v129
    %v492 = vunpack.c.l.b16 %v130
    %v493 = vunpack.c.h.b16 %v130
    %v494 = vunpack.c.l.b16 %v131
    %v495 = vunpack.c.h.b16 %v131
    %v496 = vunpack.c.l.b16 %v132
    %v497 = vunpack.c.h.b16 %v132
    %v498 = vunpack.c.l.b16 %v133
    %v499 = vunpack.c.h.b16 %v133
    %v500 = vunpack.c.l.b16 %v134
    %v501 = vunpack.c.h.b16 %v134
    %v502 = vunpack.c.l.b16 %v135
    %v503 = vunpack.c.h.b16 %v135
    %v504 = vunpack.c.l.b16 %v136
    %v505 = vunpack.c.h.b16 %v136
    %v506 = vunpack.c.l.b16 %v137
    %v507 = vunpack.c.h.b16 %v137
    %v508 = vunpack.c.l.b16 %v138
    %v509 = vunpack.c.h.b16 %v138
    %v510 = vunpack.c.l.b16 %v139
    %v511 = vunpack.c.h.b16 %v139
    %v512 = vunpack.c.l.b16 %v140
    %v513 = vunpack.c.h.b16 %v140
    %v514 = vunpack.c.l.b16 %v141
    %v515 = vunpack.c.h.b16 %v141
    %v516 = vunpack.c.l.b16 %v142
    %v517 = vunpack.c.h.b16 %v142
    %v518 = vunpack.c.l.b16 %v143
    %v519 = vunpack.c.h.b16 %v143
    %v520 = vunpack.c.l.b16 %v144
    %v521 = vunpack.c.h.b16 %v144
    %v522 = vunpack.c.l.b16 %v145
    %v523 = vunpack.c.h.b16 %v145
    %v524 = vunpack.c.l.b16 %v146
    %v525 = vunpack.c.h.b16 %v146
    %v526 = vunpack.c.l.b16 %v147
    %v527 = vunpack.c.h.b16 %v147
    %v528 = vunpack.c.l.b16 %v148
    %v529 = vunpack.c.h.b16 %v148
    %v530 = vunpack.c.l.b16 %v149
    %v531 = vunpack.c.h.b16 %v149
    %v532 = vunpack.c.l.b16 %v150
    %v533 = vunpack.c.h.b16 %v150
    %v534 = vunpack.c.l.b16 %v151
    %v535 = vunpack.c.h.b16 %v151
    %v536 = vunpack.c.l.b16 %v152
    %v537 = vunpack.c.h.b16 %v152
    %v538 = vunpack.c.l.b16 %v153
    %v539 = vunpack.c.h.b16 %v153
    %v540 = vunpack.c.l.b16 %v154
    %v541 = vunpack.c.h.b16 %v154
    %v542 = vunpack.c.l.b16 %v155
    %v543 = vunpack.c.h.b16 %v155
    %v544 = vunpack.c.l.b16 %v156
    %v545 = vunpack.c.h.b16 %v156
    %v546 = vunpack.c.l.b16 %v157
    %v547 = vunpack.c.h.b16 %v157
    %v548 = vunpack.c.l.b16 %v158
    %v549 = vunpack.c.h.b16 %v158
    %v550 = vunpack.c.l.b16 %v159
    %v551 = vunpack.c.h.b16 %v159
    %v552 = vunpack.c.l.b16 %v160
    %v553 = vunpack.c.h.b16 %v160
    %v554 = vunpack.c.l.b16 %v161
    %v555 = vunpack.c.h.b16 %v161
    %v556 = vunpack.c.l.b16 %v162
    %v557 = vunpack.c.h.b16 %v162
    %v558 = vunpack.c.l.b16 %v163
    %v559 = vunpack.c.h.b16 %v163
    %v560 = vunpack.c.l.b16 %v164
    %v561 = vunpack.c.h.b16 %v164
    %v562 = vunpack.c.l.b16 %v165
    %v563 = vunpack.c.h.b16 %v165
    %v564 = vunpack.c.l.b16 %v166
    %v565 = vunpack.c.h.b16 %v166
    %v566 = vunpack.c.l.b16 %v167
    %v567 = vunpack.c.h.b16 %v167
    %v568 = vunpack.c.l.b16 %v168
    %v569 = vunpack.c.h.b16 %v168
    %v570 = vunpack.c.l.b16 %v169
    %v571 = vunpack.c.h.b16 %v169
    %v572 = vunpack.c.l.b16 %v170
    %v573 = vunpack.c.h.b16 %v170
    %v574 = vunpack.c.l.b16 %v171
    %v575 = vunpack.c.h.b16 %v171
    %v576 = vunpack.c.l.b16 %v172
    %v577 = vunpack.c.h.b16 %v172
    %v578 = vunpack.c.l.b16 %v173
    %v579 = vunpack.c.h.b16 %v173
    %v580 = vunpack.c.l.b16 %v174
    %v581 = vunpack.c.h.b16 %v174
    %v582 = vunpack.c.l.b16 %v175
    %v583 = vunpack.c.h.b16 %v175
    %v584 = vunpack.c.l.b16 %v176
    %v585 = vunpack.c.h.b16 %v176
    %v586 = vunpack.c.l.b16 %v177
    %v587 = vunpack.c.h.b16 %v177
    %v588 = vunpack.c.l.b16 %v178
    %v589 = vunpack.c.h.b16 %v178
    %v590 = vunpack.c.l.b16 %v179
    %v591 = vunpack.c.h.b16 %v179
    %v592 = vunpack.c.l.b16 %v180
    %v593 = vunpack.c.h.b16 %v180
    %v594 = vunpack.c.l.b16 %v181
    %v595 = vunpack.c.h.b16 %v181
    %v596 = vunpack.c.l.b16 %v182
    %v597 = vunpack.c.h.b16 %v182
    %v598 = vunpack.c.l.b16 %v183
    %v599 = vunpack.c.h.b16 %v183
    %v600 = vunpack.c.l.b16 %v184
    %v601 = vunpack.c.h.b16 %v184
    %v602 = vunpack.c.l.b16 %v185
    %v603 = vunpack.c.h.b16 %v185
    %v604 = vunpack.c.l.b16 %v186
    %v605 = vunpack.c.h.b16 %v186
    %v606 = vunpack.c.l.b16 %v187
    %v607 = vunpack.c.h.b16 %v187
    %v608 = vunpack.c.l.b16 %v188
    %v609 = vunpack.c.h.b16 %v188
    %v610 = vunpack.c.l.b16 %v189
    %v611 = vunpack.c.h.b16 %v189
    %v612 = vunpack.c.l.b16 %v190
    %v613 = vunpack.c.h.b16 %v190
    %v614 = vunpack.c.l.b16 %v191
    %v615 = vunpack.c.h.b16 %v191
    %v616 = vunpack.c.l.b16 %v192
    %v617 = vunpack.c.h.b16 %v192
    %v618 = vunpack.c.l.b16 %v193
    %v619 = vunpack.c.h.b16 %v193
    %v620 = vunpack.c.l.b16 %v194
    %v621 = vunpack.c.h.b16 %v194
    %v622 = vunpack.c.l.b16 %v195
    %v623 = vunpack.c.h.b16 %v195
    %v624 = vunpack.c.l.b16 %v196
    %v625 = vunpack.c.h.b16 %v196
    %v626 = vunpack.c.l.b16 %v197
    %v627 = vunpack.c.h.b16 %v197
    %v628 = vunpack.c.l.b16 %v198
    %v629 = vunpack.c.h.b16 %v198
    %v630 = vunpack.c.l.b16 %v199
    %v631 = vunpack.c.h.b16 %v199
    %v632 = vunpack.c.l.b16 %v200
    %v633 = vunpack.c.h.b16 %v200
    %v634 = vunpack.c.l.b16 %v201
    %v635 = vunpack.c.h.b16 %v201
    %v636 = vunpack.c.l.b16 %v202
    %v637 = vunpack.c.h.b16 %v202
    %v638 = vunpack.c.l.b16 %v203
    %v639 = vunpack.c.h.b16 %v203
    %v640 = vunpack.c.l.b16 %v204
    %v641 = vunpack.c.h.b16 %v204
    %v642 = vunpack.c.l.b16 %v205
    %v643 = vunpack.c.h.b16 %v205
    %v644 = vunpack.c.l.b16 %v206
    %v645 = vunpack.c.h.b16 %v206
    %v646 = vunpack.c.l.b16 %v207
    %v647 = vunpack.c.h.b16 %v207
    %v648 = vunpack.c.l.b16 %v208
    %v649 = vunpack.c.h.b16 %v208
    %v650 = vunpack.c.l.b16 %v209
    %v651 = vunpack.c.h.b16 %v209
    %v652 = vunpack.c.l.b16 %v210
    %v653 = vunpack.c.h.b16 %v210
    %v654 = vunpack.c.l.b16 %v211
    %v655 = vunpack.c.h.b16 %v211
    %v656 = vunpack.c.l.b16 %v212
    %v657 = vunpack.c.h.b16 %v212
    %v658 = vunpack.c.l.b16 %v213
    %v659 = vunpack.c.h.b16 %v213
    %v660 = vunpack.c.l.b16 %v214
    %v661 = vunpack.c.h.b16 %v214
    %v662 = vunpack.c.l.b16 %v215
    %v663 = vunpack.c.h.b16 %v215
    %v664 = vunpack.c.l.b16 %v216
    %v665 = vunpack.c.h.b16 %v216
    %v666 = vunpack.c.l.b16 %v217
    %v667 = vunpack.c.h.b16 %v217
    %v668 = vunpack.c.l.b16 %v218
    %v669 = vunpack.c.h.b16 %v218
    %v670 = vunpack.c.l.b16 %v219
    %v671 = vunpack.c.h.b16 %v219
    %v672 = vunpack.c.l.b16 %v220
    %v673 = vunpack.c.h.b16 %v220
    %v674 = vunpack.c.l.b16 %v221
    %v675 = vunpack.c.h.b16 %v221
    %v676 = vunpack.c.l.b16 %v222
    %v677 = vunpack.c.h.b16 %v222
    %v678 = vunpack.c.l.b16 %v223
    %v679 = vunpack.c.h.b16 %v223
    %v680 = vunpack.c.l.b16 %v224
    %v681 = vunpack.c.h.b16 %v224
    %v682 = vunpack.c.l.b16 %v225
    %v683 = vunpack.c.h.b16 %v225
    %v684 = vunpack.c.l.b16 %v226
    %v685 = vunpack.c.h.b16 %v226
    %v686 = vunpack.c.l.b16 %v227
    %v687 = vunpack.c.h.b16 %v227
    %v688 = vunpack.c.l.b16 %v228
    %v689 = vunpack.c.h.b16 %v228
    %v690 = vunpack.c.l.b16 %v229
    %v691 = vunpack.c.h.b16 %v229
    %v692 = vpack.c.b16 %v420, %v412
    %v693 = vpack.c.b16 %v421, %v413
    %v694 = vpack.c.b16 %v422, %v414
    %v695 = vpack.c.b16 %v423, %v415
    %v696 = vpack.c.b16 %v424, %v416
    %v697 = vpack.c.b16 %v425, %v417
    %v698 = vpack.c.b16 %v426, %v418
    %v699 = vpack.c.b16 %v427, %v419
    %v700 = vpack.c.b16 %v436, %v428
    %v701 = vpack.c.b16 %v437, %v429
    %v702 = vpack.c.b16 %v438, %v430
    %v703 = vpack.c.b16 %v439, %v431
    %v704 = vpack.c.b16 %v440, %v432
    %v705 = vpack.c.b16 %v441, %v433
    %v706 = vpack.c.b16 %v442, %v434
    %v707 = vpack.c.b16 %v443, %v435
    %v708 = vpack.c.b16 %v452, %v444
    %v709 = vpack.c.b16 %v453, %v445
    %v710 = vpack.c.b16 %v454, %v446
    %v711 = vpack.c.b16 %v455, %v447
    %v712 = vpack.c.b16 %v456, %v448
    %v713 = vpack.c.b16 %v457, %v449
    %v714 = vpack.c.b16 %v458, %v450
    %v715 = vpack.c.b16 %v459, %v451
    %v716 = vpack.c.b16 %v468, %v460
    %v717 = vpack.c.b16 %v469, %v461
    %v718 = vpack.c.b16 %v470, %v462
    %v719 = vpack.c.b16 %v471, %v463
    %v720 = vpack.c.b16 %v472, %v464
    %v721 = vpack.c.b16 %v473, %v465
    %v722 = vpack.c.b16 %v474, %v466
    %v723 = vpack.c.b16 %v475, %v467
    %v724 = vpack.c.b16 %v484, %v476
    %v725 = vpack.c.b16 %v485, %v477
    %v726 = vpack.c.b16 %v486, %v478
    %v727 = vpack.c.b16 %v487, %v479
    %v728 = vpack.c.b16 %v488, %v480
    %v729 = vpack.c.b16 %v489, %v481
    %v730 = vpack.c.b16 %v490, %v482
    %v731 = vpack.c.b16 %v491, %v483
    %v732 = vpack.c.b16 %v500, %v492
    %v733 = vpack.c.b16 %v501, %v493
    %v734 = vpack.c.b16 %v502, %v494
    %v735 = vpack.c.b16 %v503, %v495
    %v736 = vpack.c.b16 %v504, %v496
    %v737 = vpack.c.b16 %v505, %v497
    %v738 = vpack.c.b16 %v506, %v498
    %v739 = vpack.c.b16 %v507, %v499
    %v740 = vpack.c.b16 %v516, %v508
    %v741 = vpack.c.b16 %v517, %v509
    %v742 = vpack.c.b16 %v518, %v510
    %v743 = vpack.c.b16 %v519, %v511
    %v744 = vpack.c.b16 %v520, %v512
    %v745 = vpack.c.b16 %v521, %v513
    %v746 = vpack.c.b16 %v522, %v514
    %v747 = vpack.c.b16 %v523, %v515
    %v748 = vpack.c.b16 %v532, %v524
    %v749 = vpack.c.b16 %v533, %v525
    %v750 = vpack.c.b16 %v534, %v526
    %v751 = vpack.c.b16 %v535, %v527
    %v752 = vpack.c.b16 %v536, %v528
    %v753 = vpack.c.b16 %v537, %v529
    %v754 = vpack.c.b16 %v538, %v530
    %v755 = vpack.c.b16 %v539, %v531
    %v756 = vpack.c.b16 %v548, %v540
    %v757 = vpack.c.b16 %v549, %v541
    %v758 = vpack.c.b16 %v550, %v542
    %v759 = vpack.c.b16 %v551, %v543
    %v760 = vpack.c.b16 %v552, %v544
    %v761 = vpack.c.b16 %v553, %v545
    %v762 = vpack.c.b16 %v554, %v546
    %v763 = vpack.c.b16 %v555, %v547
    %v764 = vpack.c.b16 %v564, %v556
    %v765 = vpack.c.b16 %v565, %v557
    %v766 = vpack.c.b16 %v566, %v558
    %v767 = vpack.c.b16 %v567, %v559
    %v768 = vpack.c.b16 %v568, %v560
    %v769 = vpack.c.b16 %v569, %v561
    %v770 = vpack.c.b16 %v570, %v562
    %v771 = vpack.c.b16 %v571, %v563
    %v772 = vpack.c.b16 %v580, %v572
    %v773 = vpack.c.b16 %v581, %v573
    %v774 = vpack.c.b16 %v582, %v574
    %v775 = vpack.c.b16 %v583, %v575
    %v776 = vpack.c.b16 %v584, %v576
    %v777 = vpack.c.b16 %v585, %v577
    %v778 = vpack.c.b16 %v586, %v578
    %v779 = vpack.c.b16 %v587, %v579
    %v780 = vpack.c.b16 %v596, %v588
    %v781 = vpack.c.b16 %v597, %v589
    %v782 = vpack.c.b16 %v598, %v590
    %v783 = vpack.c.b16 %v599, %v591
    %v784 = vpack.c.b16 %v600, %v592
    %v785 = vpack.c.b16 %v601, %v593
    %v786 = vpack.c.b16 %v602, %v594
    %v787 = vpack.c.b16 %v603, %v595
    %v788 = vpack.c.b16 %v612, %v604
    %v789 = vpack.c.b16 %v613, %v605
    %v790 = vpack.c.b16 %v614, %v606
    %v791 = vpack.c.b16 %v615, %v607
    %v792 = vpack.c.b16 %v616, %v608
    %v793 = vpack.c.b16 %v617, %v609
    %v794 = vpack.c.b16 %v618, %v610
    %v795 = vpack.c.b16 %v619, %v611
    %v796 = vpack.c.b16 %v628, %v620
    %v797 = vpack.c.b16 %v629, %v621
    %v798 = vpack.c.b16 %v630, %v622
    %v799 = vpack.c.b16 %v631, %v623
    %v800 = vpack.c.b16 %v632, %v624
    %v801 = vpack.c.b16 %v633, %v625
    %v802 = vpack.c.b16 %v634, %v626
    %v803 = vpack.c.b16 %v635, %v627
    %v804 = vpack.c.b16 %v644, %v636
    %v805 = vpack.c.b16 %v645, %v637
    %v806 = vpack.c.b16 %v646, %v638
    %v807 = vpack.c.b16 %v647, %v639
    %v808 = vpack.c.b16 %v648, %v640
    %v809 = vpack.c.b16 %v649, %v641
    %v810 = vpack.c.b16 %v650, %v642
    %v811 = vpack.c.b16 %v651, %v643
    %v812 = vpack.c.b16 %v660, %v652
    %v813 = vpack.c.b16 %v661, %v653
    %v814 = vpack.c.b16 %v662, %v654
    %v815 = vpack.c.b16 %v663, %v655
    %v816 = vpack.c.b16 %v664, %v656
    %v817 = vpack.c.b16 %v665, %v657
    %v818 = vpack.c.b16 %v666, %v658
    %v819 = vpack.c.b16 %v667, %v659
    %v820 = vpack.c.b16 %v676, %v668
    %v821 = vpack.c.b16 %v677, %v669
    %v822 = vpack.c.b16 %v678, %v670
    %v823 = vpack.c.b16 %v679, %v671
    %v824 = vpack.c.b16 %v680, %v672
    %v825 = vpack.c.b16 %v681, %v673
    %v826 = vpack.c.b16 %v682, %v674
    %v827 = vpack.c.b16 %v683, %v675
    %v828 = vpack.c.b16 %v684, %v684
    %v829 = vpack.c.b16 %v685, %v685
    %v830 = vpack.c.b16 %v686, %v686
    %v831 = vpack.c.b16 %v687, %v687
    %v832 = vpack.c.b16 %v688, %v688
    %v833 = vpack.c.b16 %v689, %v689
    %v834 = vpack.c.b16 %v690, %v690
    %v835 = vpack.c.b16 %v691, %v691
    %vm972 = vcmask 138240
    %v974 = vsel %vm972, %v89, 0
    %vm976 = vcmask 1040384
    %v977 = vsel 0, 4294967295, 65535
    %v978 = vsel %vm976, %v977, 0
    %v980 = vand.u32 %v828, %v978
    %v983 = vand.u32 %v829, %v978
    %v986 = vand.u32 %v830, %v978
    %v989 = vand.u32 %v831, %v978
    %v992 = vand.u32 %v832, %v978
    %v995 = vand.u32 %v833, %v978
    %v998 = vand.u32 %v834, %v978
    %v1001 = vand.u32 %v835, %v978
    %1003 = vmatprep.subr.bf16.mxu0 %v693
    %1004 = vmatpush1.bf16.msra.mxu0 %v692
    %1005 = vmatprep.subr.bf16.mxu0 %v701
    %1006 = vmatpush1.bf16.msra.mxu0 %v700
    %1007 = vmatprep.subr.bf16.mxu0 %v709
    %1008 = vmatpush1.bf16.msra.mxu0 %v708
    %1009 = vmatprep.subr.bf16.mxu0 %v717
    %1010 = vmatpush1.bf16.msra.mxu0 %v716
    %1011 = vmatprep.subr.bf16.mxu0 %v725
    %1012 = vmatpush1.bf16.msra.mxu0 %v724
    %1013 = vmatprep.subr.bf16.mxu0 %v733
    %1014 = vmatpush1.bf16.msra.mxu0 %v732
    %1015 = vmatprep.subr.bf16.mxu0 %v741
    %1016 = vmatpush1.bf16.msra.mxu0 %v740
    %1017 = vmatprep.subr.bf16.mxu0 %v749
    %1018 = vmatpush1.bf16.msra.mxu0 %v748
    %1019 = vmatprep.subr.bf16.mxu0 %v757
    %1020 = vmatpush1.bf16.msra.mxu0 %v756
    %1021 = vmatprep.subr.bf16.mxu0 %v765
    %1022 = vmatpush1.bf16.msra.mxu0 %v764
    %1023 = vmatprep.subr.bf16.mxu0 %v773
    %1024 = vmatpush1.bf16.msra.mxu0 %v772
    %1025 = vmatprep.subr.bf16.mxu0 %v781
    %1026 = vmatpush1.bf16.msra.mxu0 %v780
    %1027 = vmatprep.subr.bf16.mxu0 %v789
    %1028 = vmatpush1.bf16.msra.mxu0 %v788
    %1029 = vmatprep.subr.bf16.mxu0 %v797
    %1030 = vmatpush1.bf16.msra.mxu0 %v796
    %1031 = vmatprep.subr.bf16.mxu0 %v805
    %1032 = vmatpush1.bf16.msra.mxu0 %v804
    %1033 = vmatprep.subr.bf16.mxu0 %v813
    %1034 = vmatpush1.bf16.msra.mxu0 %v812
    %1035 = vmatprep.mubr.bf16.mxu0 %v88
    %1036 = vmatmul.mubr.bf16.gmra.mrb[0].mxu0 %v87
    %v1037 = vpop.f32.mrb[0].mxu0
    %v1038 = vadd.f32 %v235, %v1037
    %v1039 = vpop.f32.mrb[0].mxu0
    %v1040 = vadd.f32 %v239, %v1039
    %v1041 = vpop.f32.mrb[0].mxu0
    %v1042 = vpop.f32.mrb[0].mxu0
    %1043 = vdwg.mxu0
    %1044 = vmatprep.subr.bf16.mxu0 %v821
    %1045 = vmatpush1.bf16.msra.mxu0 %v820
    %1046 = vmatprep.subr.bf16.mxu0 %v983
    %1047 = vmatpush1.bf16.msra.mxu0 %v980
    %1048 = vmatprep.subr.bf16.mxu0 0
    %1049 = vmatpush1.bf16.msra.mxu0 0
    %1050 = vmatprep.subr.bf16.mxu0 0
    %1051 = vmatpush1.bf16.msra.mxu0 0
    %1052 = vmatprep.subr.bf16.mxu0 0
    %1053 = vmatpush1.bf16.msra.mxu0 0
    %1054 = vmatprep.subr.bf16.mxu0 0
    %1055 = vmatpush1.bf16.msra.mxu0 0
    %1056 = vmatprep.subr.bf16.mxu0 0
    %1057 = vmatpush1.bf16.msra.mxu0 0
    %1058 = vmatprep.subr.bf16.mxu0 0
    %1059 = vmatpush1.bf16.msra.mxu0 0
    %1060 = vmatprep.subr.bf16.mxu0 0
    %1061 = vmatpush1.bf16.msra.mxu0 0
    %1062 = vmatprep.subr.bf16.mxu0 0
    %1063 = vmatpush1.bf16.msra.mxu0 0
    %1064 = vmatprep.subr.bf16.mxu0 0
    %1065 = vmatpush1.bf16.msra.mxu0 0
    %1066 = vmatprep.subr.bf16.mxu0 0
    %1067 = vmatpush1.bf16.msra.mxu0 0
    %1068 = vmatprep.subr.bf16.mxu0 0
    %1069 = vmatpush1.bf16.msra.mxu0 0
    %1070 = vmatprep.subr.bf16.mxu0 0
    %1071 = vmatpush1.bf16.msra.mxu0 0
    %1072 = vmatprep.subr.bf16.mxu0 0
    %1073 = vmatpush1.bf16.msra.mxu0 0
    %1074 = vmatprep.subr.bf16.mxu0 0
    %1075 = vmatpush1.bf16.msra.mxu0 0
    %1076 = vmatprep.mubr.bf16.mxu0 0
    %1077 = vmatmul.mubr.bf16.gmra.mrb[0].mxu0 %v974
    %v1078 = vpop.f32.mrb[0].mxu0
    %v1079 = vadd.f32 %v1038, %v1078
    %v1080 = vpop.f32.mrb[0].mxu0
    %v1081 = vadd.f32 %v1040, %v1080
    %v1082 = vpop.f32.mrb[0].mxu0
    %v1083 = vpop.f32.mrb[0].mxu0
    %1084 = vdwg.mxu0
    %1085 = vmatprep.subr.bf16.mxu0 %v695
    %1086 = vmatpush1.bf16.msra.mxu0 %v694
    %1087 = vmatprep.subr.bf16.mxu0 %v703
    %1088 = vmatpush1.bf16.msra.mxu0 %v702
    %1089 = vmatprep.subr.bf16.mxu0 %v711
    %1090 = vmatpush1.bf16.msra.mxu0 %v710
    %1091 = vmatprep.subr.bf16.mxu0 %v719
    %1092 = vmatpush1.bf16.msra.mxu0 %v718
    %1093 = vmatprep.subr.bf16.mxu0 %v727
    %1094 = vmatpush1.bf16.msra.mxu0 %v726
    %1095 = vmatprep.subr.bf16.mxu0 %v735
    %1096 = vmatpush1.bf16.msra.mxu0 %v734
    %1097 = vmatprep.subr.bf16.mxu0 %v743
    %1098 = vmatpush1.bf16.msra.mxu0 %v742
    %1099 = vmatprep.subr.bf16.mxu0 %v751
    %1100 = vmatpush1.bf16.msra.mxu0 %v750
    %1101 = vmatprep.subr.bf16.mxu0 %v759
    %1102 = vmatpush1.bf16.msra.mxu0 %v758
    %1103 = vmatprep.subr.bf16.mxu0 %v767
    %1104 = vmatpush1.bf16.msra.mxu0 %v766
    %1105 = vmatprep.subr.bf16.mxu0 %v775
    %1106 = vmatpush1.bf16.msra.mxu0 %v774
    %1107 = vmatprep.subr.bf16.mxu0 %v783
    %1108 = vmatpush1.bf16.msra.mxu0 %v782
    %1109 = vmatprep.subr.bf16.mxu0 %v791
    %1110 = vmatpush1.bf16.msra.mxu0 %v790
    %1111 = vmatprep.subr.bf16.mxu0 %v799
    %1112 = vmatpush1.bf16.msra.mxu0 %v798
    %1113 = vmatprep.subr.bf16.mxu0 %v807
    %1114 = vmatpush1.bf16.msra.mxu0 %v806
    %1115 = vmatprep.subr.bf16.mxu0 %v815
    %1116 = vmatpush1.bf16.msra.mxu0 %v814
    %1117 = vmatprep.mubr.bf16.mxu0 %v88
    %1118 = vmatmul.mubr.bf16.gmra.mrb[0].mxu0 %v87
    %v1119 = vpop.f32.mrb[0].mxu0
    %v1120 = vadd.f32 %v243, %v1119
    %v1121 = vpop.f32.mrb[0].mxu0
    %v1122 = vadd.f32 %v247, %v1121
    %v1123 = vpop.f32.mrb[0].mxu0
    %v1124 = vpop.f32.mrb[0].mxu0
    %1125 = vdwg.mxu0
    %1126 = vmatprep.subr.bf16.mxu0 %v823
    %1127 = vmatpush1.bf16.msra.mxu0 %v822
    %1128 = vmatprep.subr.bf16.mxu0 %v989
    %1129 = vmatpush1.bf16.msra.mxu0 %v986
    %1130 = vmatprep.subr.bf16.mxu0 0
    %1131 = vmatpush1.bf16.msra.mxu0 0
    %1132 = vmatprep.subr.bf16.mxu0 0
    %1133 = vmatpush1.bf16.msra.mxu0 0
    %1134 = vmatprep.subr.bf16.mxu0 0
    %1135 = vmatpush1.bf16.msra.mxu0 0
    %1136 = vmatprep.subr.bf16.mxu0 0
    %1137 = vmatpush1.bf16.msra.mxu0 0
    %1138 = vmatprep.subr.bf16.mxu0 0
    %1139 = vmatpush1.bf16.msra.mxu0 0
    %1140 = vmatprep.subr.bf16.mxu0 0
    %1141 = vmatpush1.bf16.msra.mxu0 0
    %1142 = vmatprep.subr.bf16.mxu0 0
    %1143 = vmatpush1.bf16.msra.mxu0 0
    %1144 = vmatprep.subr.bf16.mxu0 0
    %1145 = vmatpush1.bf16.msra.mxu0 0
    %1146 = vmatprep.subr.bf16.mxu0 0
    %1147 = vmatpush1.bf16.msra.mxu0 0
    %1148 = vmatprep.subr.bf16.mxu0 0
    %1149 = vmatpush1.bf16.msra.mxu0 0
    %1150 = vmatprep.subr.bf16.mxu0 0
    %1151 = vmatpush1.bf16.msra.mxu0 0
    %1152 = vmatprep.subr.bf16.mxu0 0
    %1153 = vmatpush1.bf16.msra.mxu0 0
    %1154 = vmatprep.subr.bf16.mxu0 0
    %1155 = vmatpush1.bf16.msra.mxu0 0
    %1156 = vmatprep.subr.bf16.mxu0 0
    %1157 = vmatpush1.bf16.msra.mxu0 0
    %1158 = vmatprep.mubr.bf16.mxu0 0
    %1159 = vmatmul.mubr.bf16.gmra.mrb[0].mxu0 %v974
    %v1160 = vpop.f32.mrb[0].mxu0
    %v1161 = vadd.f32 %v1120, %v1160
    %v1162 = vpop.f32.mrb[0].mxu0
    %v1163 = vadd.f32 %v1122, %v1162
    %v1164 = vpop.f32.mrb[0].mxu0
    %v1165 = vpop.f32.mrb[0].mxu0
    %1166 = vdwg.mxu0
    %1167 = vmatprep.subr.bf16.mxu0 %v697
    %1168 = vmatpush1.bf16.msra.mxu0 %v696
    %1169 = vmatprep.subr.bf16.mxu0 %v705
    %1170 = vmatpush1.bf16.msra.mxu0 %v704
    %1171 = vmatprep.subr.bf16.mxu0 %v713
    %1172 = vmatpush1.bf16.msra.mxu0 %v712
    %1173 = vmatprep.subr.bf16.mxu0 %v721
    %1174 = vmatpush1.bf16.msra.mxu0 %v720
    %1175 = vmatprep.subr.bf16.mxu0 %v729
    %1176 = vmatpush1.bf16.msra.mxu0 %v728
    %1177 = vmatprep.subr.bf16.mxu0 %v737
    %1178 = vmatpush1.bf16.msra.mxu0 %v736
    %1179 = vmatprep.subr.bf16.mxu0 %v745
    %1180 = vmatpush1.bf16.msra.mxu0 %v744
    %1181 = vmatprep.subr.bf16.mxu0 %v753
    %1182 = vmatpush1.bf16.msra.mxu0 %v752
    %1183 = vmatprep.subr.bf16.mxu0 %v761
    %1184 = vmatpush1.bf16.msra.mxu0 %v760
    %1185 = vmatprep.subr.bf16.mxu0 %v769
    %1186 = vmatpush1.bf16.msra.mxu0 %v768
    %1187 = vmatprep.subr.bf16.mxu0 %v777
    %1188 = vmatpush1.bf16.msra.mxu0 %v776
    %1189 = vmatprep.subr.bf16.mxu0 %v785
    %1190 = vmatpush1.bf16.msra.mxu0 %v784
    %1191 = vmatprep.subr.bf16.mxu0 %v793
    %1192 = vmatpush1.bf16.msra.mxu0 %v792
    %1193 = vmatprep.subr.bf16.mxu0 %v801
    %1194 = vmatpush1.bf16.msra.mxu0 %v800
    %1195 = vmatprep.subr.bf16.mxu0 %v809
    %1196 = vmatpush1.bf16.msra.mxu0 %v808
    %1197 = vmatprep.subr.bf16.mxu0 %v817
    %1198 = vmatpush1.bf16.msra.mxu0 %v816
    %1199 = vmatprep.mubr.bf16.mxu0 %v88
    %1200 = vmatmul.mubr.bf16.gmra.mrb[0].mxu0 %v87
    %v1201 = vpop.f32.mrb[0].mxu0
    %v1202 = vadd.f32 %v251, %v1201
    %v1203 = vpop.f32.mrb[0].mxu0
    %v1204 = vadd.f32 %v255, %v1203
    %v1205 = vpop.f32.mrb[0].mxu0
    %v1206 = vpop.f32.mrb[0].mxu0
    %1207 = vdwg.mxu0
    %1208 = vmatprep.subr.bf16.mxu0 %v825
    %1209 = vmatpush1.bf16.msra.mxu0 %v824
    %1210 = vmatprep.subr.bf16.mxu0 %v995
    %1211 = vmatpush1.bf16.msra.mxu0 %v992
    %1212 = vmatprep.subr.bf16.mxu0 0
    %1213 = vmatpush1.bf16.msra.mxu0 0
    %1214 = vmatprep.subr.bf16.mxu0 0
    %1215 = vmatpush1.bf16.msra.mxu0 0
    %1216 = vmatprep.subr.bf16.mxu0 0
    %1217 = vmatpush1.bf16.msra.mxu0 0
    %1218 = vmatprep.subr.bf16.mxu0 0
    %1219 = vmatpush1.bf16.msra.mxu0 0
    %1220 = vmatprep.subr.bf16.mxu0 0
    %1221 = vmatpush1.bf16.msra.mxu0 0
    %1222 = vmatprep.subr.bf16.mxu0 0
    %1223 = vmatpush1.bf16.msra.mxu0 0
    %1224 = vmatprep.subr.bf16.mxu0 0
    %1225 = vmatpush1.bf16.msra.mxu0 0
    %1226 = vmatprep.subr.bf16.mxu0 0
    %1227 = vmatpush1.bf16.msra.mxu0 0
    %1228 = vmatprep.subr.bf16.mxu0 0
    %1229 = vmatpush1.bf16.msra.mxu0 0
    %1230 = vmatprep.subr.bf16.mxu0 0
    %1231 = vmatpush1.bf16.msra.mxu0 0
    %1232 = vmatprep.subr.bf16.mxu0 0
    %1233 = vmatpush1.bf16.msra.mxu0 0
    %1234 = vmatprep.subr.bf16.mxu0 0
    %1235 = vmatpush1.bf16.msra.mxu0 0
    %1236 = vmatprep.subr.bf16.mxu0 0
    %1237 = vmatpush1.bf16.msra.mxu0 0
    %1238 = vmatprep.subr.bf16.mxu0 0
    %1239 = vmatpush1.bf16.msra.mxu0 0
    %1240 = vmatprep.mubr.bf16.mxu0 0
    %1241 = vmatmul.mubr.bf16.gmra.mrb[0].mxu0 %v974
    %v1242 = vpop.f32.mrb[0].mxu0
    %v1243 = vadd.f32 %v1202, %v1242
    %v1244 = vpop.f32.mrb[0].mxu0
    %v1245 = vadd.f32 %v1204, %v1244
    %v1246 = vpop.f32.mrb[0].mxu0
    %v1247 = vpop.f32.mrb[0].mxu0
    %1248 = vdwg.mxu0
    %1249 = vmatprep.subr.bf16.mxu0 %v699
    %1250 = vmatpush1.bf16.msra.mxu0 %v698
    %1251 = vmatprep.subr.bf16.mxu0 %v707
    %1252 = vmatpush1.bf16.msra.mxu0 %v706
    %1253 = vmatprep.subr.bf16.mxu0 %v715
    %1254 = vmatpush1.bf16.msra.mxu0 %v714
    %1255 = vmatprep.subr.bf16.mxu0 %v723
    %1256 = vmatpush1.bf16.msra.mxu0 %v722
    %1257 = vmatprep.subr.bf16.mxu0 %v731
    %1258 = vmatpush1.bf16.msra.mxu0 %v730
    %1259 = vmatprep.subr.bf16.mxu0 %v739
    %1260 = vmatpush1.bf16.msra.mxu0 %v738
    %1261 = vmatprep.subr.bf16.mxu0 %v747
    %1262 = vmatpush1.bf16.msra.mxu0 %v746
    %1263 = vmatprep.subr.bf16.mxu0 %v755
    %1264 = vmatpush1.bf16.msra.mxu0 %v754
    %1265 = vmatprep.subr.bf16.mxu0 %v763
    %1266 = vmatpush1.bf16.msra.mxu0 %v762
    %1267 = vmatprep.subr.bf16.mxu0 %v771
    %1268 = vmatpush1.bf16.msra.mxu0 %v770
    %1269 = vmatprep.subr.bf16.mxu0 %v779
    %1270 = vmatpush1.bf16.msra.mxu0 %v778
    %1271 = vmatprep.subr.bf16.mxu0 %v787
    %1272 = vmatpush1.bf16.msra.mxu0 %v786
    %1273 = vmatprep.subr.bf16.mxu0 %v795
    %1274 = vmatpush1.bf16.msra.mxu0 %v794
    %1275 = vmatprep.subr.bf16.mxu0 %v803
    %1276 = vmatpush1.bf16.msra.mxu0 %v802
    %1277 = vmatprep.subr.bf16.mxu0 %v811
    %1278 = vmatpush1.bf16.msra.mxu0 %v810
    %1279 = vmatprep.subr.bf16.mxu0 %v819
    %1280 = vmatpush1.bf16.msra.mxu0 %v818
    %1281 = vmatprep.mubr.bf16.mxu0 %v88
    %1282 = vmatmul.mubr.bf16.gmra.mrb[0].mxu0 %v87
    %v1283 = vpop.f32.mrb[0].mxu0
    %v1284 = vadd.f32 %v259, %v1283
    %v1285 = vpop.f32.mrb[0].mxu0
    %v1286 = vadd.f32 %v263, %v1285
    %v1287 = vpop.f32.mrb[0].mxu0
    %v1288 = vpop.f32.mrb[0].mxu0
    %1289 = vdwg.mxu0
    %1290 = vmatprep.subr.bf16.mxu0 %v827
    %1291 = vmatpush1.bf16.msra.mxu0 %v826
    %1292 = vmatprep.subr.bf16.mxu0 %v1001
    %1293 = vmatpush1.bf16.msra.mxu0 %v998
    %1294 = vmatprep.subr.bf16.mxu0 0
    %1295 = vmatpush1.bf16.msra.mxu0 0
    %1296 = vmatprep.subr.bf16.mxu0 0
    %1297 = vmatpush1.bf16.msra.mxu0 0
    %1298 = vmatprep.subr.bf16.mxu0 0
    %1299 = vmatpush1.bf16.msra.mxu0 0
    %1300 = vmatprep.subr.bf16.mxu0 0
    %1301 = vmatpush1.bf16.msra.mxu0 0
    %1302 = vmatprep.subr.bf16.mxu0 0
    %1303 = vmatpush1.bf16.msra.mxu0 0
    %1304 = vmatprep.subr.bf16.mxu0 0
    %1305 = vmatpush1.bf16.msra.mxu0 0
    %1306 = vmatprep.subr.bf16.mxu0 0
    %1307 = vmatpush1.bf16.msra.mxu0 0
    %1308 = vmatprep.subr.bf16.mxu0 0
    %1309 = vmatpush1.bf16.msra.mxu0 0
    %1310 = vmatprep.subr.bf16.mxu0 0
    %1311 = vmatpush1.bf16.msra.mxu0 0
    %1312 = vmatprep.subr.bf16.mxu0 0
    %1313 = vmatpush1.bf16.msra.mxu0 0
    %1314 = vmatprep.subr.bf16.mxu0 0
    %1315 = vmatpush1.bf16.msra.mxu0 0
    %1316 = vmatprep.subr.bf16.mxu0 0
    %1317 = vmatpush1.bf16.msra.mxu0 0
    %1318 = vmatprep.subr.bf16.mxu0 0
    %1319 = vmatpush1.bf16.msra.mxu0 0
    %1320 = vmatprep.subr.bf16.mxu0 0
    %1321 = vmatpush1.bf16.msra.mxu0 0
    %1322 = vmatprep.mubr.bf16.mxu0 0
    %1323 = vmatmul.mubr.bf16.gmra.mrb[0].mxu0 %v974
    %v1324 = vpop.f32.mrb[0].mxu0
    %v1325 = vadd.f32 %v1284, %v1324
    %v1326 = vpop.f32.mrb[0].mxu0
    %v1327 = vadd.f32 %v1286, %v1326
    %v1328 = vpop.f32.mrb[0].mxu0
    %v1329 = vpop.f32.mrb[0].mxu0
    %1330 = vdwg.mxu0
    %v1331 = vmax.f32 %v1079, 0.0
    %v1332 = vmax.f32 %v1081, 0.0
    %v1333 = vmax.f32 %v1161, 0.0
    %v1334 = vmax.f32 %v1163, 0.0
    %v1335 = vmax.f32 %v1243, 0.0
    %v1336 = vmax.f32 %v1245, 0.0
    %v1337 = vmax.f32 %v1325, 0.0
    %v1338 = vmax.f32 %v1327, 0.0
    %v1339 = vpack.c.bf16 %v1331, %v1331
    %v1340 = vpack.c.bf16 %v1332, %v1332
    %v1341 = vpack.c.bf16 %v1333, %v1333
    %v1342 = vpack.c.bf16 %v1334, %v1334
    %v1343 = vpack.c.bf16 %v1335, %v1335
    %v1344 = vpack.c.bf16 %v1336, %v1336
    %v1345 = vpack.c.bf16 %v1337, %v1337
    %v1346 = vpack.c.bf16 %v1338, %v1338
    %v1347 = vld [vmem:[#allocation8] sm:$0xff]
    %v1348 = vld [vmem:[#allocation8 + $0x8] sm:$0xf]
    %v1349 = vld [vmem:[#allocation8 + $0xc] sm:$0xff]
    %v1350 = vld [vmem:[#allocation8 + $0x14] sm:$0xf]
    %v1351 = vld [vmem:[#allocation8 + $0x18] sm:$0xff]
    %v1352 = vld [vmem:[#allocation8 + $0x20] sm:$0xf]
    %v1353 = vld [vmem:[#allocation8 + $0x24] sm:$0xff]
    %v1354 = vld [vmem:[#allocation8 + $0x2c] sm:$0xf]
    %v1355 = vld [vmem:[#allocation8 + $0x30] sm:$0xff]
    %v1356 = vld [vmem:[#allocation8 + $0x38] sm:$0xf]
    %v1357 = vld [vmem:[#allocation8 + $0x3c] sm:$0xff]
    %v1358 = vld [vmem:[#allocation8 + $0x44] sm:$0xf]
    %v1359 = vld [vmem:[#allocation8 + $0x48] sm:$0xff]
    %v1360 = vld [vmem:[#allocation8 + $0x50] sm:$0xf]
    %v1361 = vld [vmem:[#allocation8 + $0x54] sm:$0xff]
    %v1362 = vld [vmem:[#allocation8 + $0x5c] sm:$0xf]
    %v1363 = vld [vmem:[#allocation8 + $0x60] sm:$0xff]
    %v1364 = vld [vmem:[#allocation8 + $0x68] sm:$0xf]
    %v1365 = vld [vmem:[#allocation8 + $0x6c] sm:$0xff]
    %v1366 = vld [vmem:[#allocation8 + $0x74] sm:$0xf]
    %v1367 = vld [vmem:[#allocation8 + $0x78] sm:$0xff]
    %v1368 = vld [vmem:[#allocation8 + $0x80] sm:$0xf]
    %v1369 = vld [vmem:[#allocation8 + $0x84] sm:$0xff]
    %v1370 = vld [vmem:[#allocation8 + $0x8c] sm:$0xf]
    %v1371 = vld [vmem:[#allocation8 + $0x90] sm:$0xff]
    %v1372 = vld [vmem:[#allocation8 + $0x98] sm:$0xf]
    %v1373 = vld [vmem:[#allocation8 + $0x9c] sm:$0xff]
    %v1374 = vld [vmem:[#allocation8 + $0xa4] sm:$0xf]
    %v1375 = vld [vmem:[#allocation8 + $0xa8] sm:$0xff]
    %v1376 = vld [vmem:[#allocation8 + $0xb0] sm:$0xf]
    %v1377 = vld [vmem:[#allocation8 + $0xb4] sm:$0xff]
    %v1378 = vld [vmem:[#allocation8 + $0xbc] sm:$0xf]
    %v1379 = vld [vmem:[#allocation8 + $0xc0] sm:$0xff]
    %v1380 = vld [vmem:[#allocation8 + $0xc8] sm:$0xf]
    %v1381 = vld [vmem:[#allocation8 + $0xcc] sm:$0xff]
    %v1382 = vld [vmem:[#allocation8 + $0xd4] sm:$0xf]
    %v1383 = vld [vmem:[#allocation8 + $0xd8] sm:$0xff]
    %v1384 = vld [vmem:[#allocation8 + $0xe0] sm:$0xf]
    %v1385 = vld [vmem:[#allocation8 + $0xe4] sm:$0xff]
    %v1386 = vld [vmem:[#allocation8 + $0xec] sm:$0xf]
    %v1387 = vld [vmem:[#allocation8 + $0xf0] sm:$0xff]
    %v1388 = vld [vmem:[#allocation8 + $0xf8] sm:$0xf]
    %v1389 = vld [vmem:[#allocation8 + $0xfc] sm:$0xff]
    %v1390 = vld [vmem:[#allocation8 + $0x104] sm:$0xf]
    %v1391 = vld [vmem:[#allocation8 + $0x108] sm:$0xff]
    %v1392 = vld [vmem:[#allocation8 + $0x110] sm:$0xf]
    %v1393 = vld [vmem:[#allocation8 + $0x114] sm:$0xff]
    %v1394 = vld [vmem:[#allocation8 + $0x11c] sm:$0xf]
    %v1395 = vld [vmem:[#allocation8 + $0x120] sm:$0xff]
    %v1396 = vld [vmem:[#allocation8 + $0x128] sm:$0xf]
    %v1397 = vld [vmem:[#allocation8 + $0x12c] sm:$0xff]
    %v1398 = vld [vmem:[#allocation8 + $0x134] sm:$0xf]
    %v1399 = vld [vmem:[#allocation8 + $0x138] sm:$0xff]
    %v1400 = vld [vmem:[#allocation8 + $0x140] sm:$0xf]
    %v1401 = vld [vmem:[#allocation8 + $0x144] sm:$0xff]
    %v1402 = vld [vmem:[#allocation8 + $0x14c] sm:$0xf]
    %v1403 = vld [vmem:[#allocation8 + $0x150] sm:$0xff]
    %v1404 = vld [vmem:[#allocation8 + $0x158] sm:$0xf]
    %v1405 = vld [vmem:[#allocation8 + $0x15c] sm:$0xff]
    %v1406 = vld [vmem:[#allocation8 + $0x164] sm:$0xf]
    %v1407 = vld [vmem:[#allocation8 + $0x168] sm:$0xff]
    %v1408 = vld [vmem:[#allocation8 + $0x170] sm:$0xf]
    %v1409 = vld [vmem:[#allocation8 + $0x174] sm:$0xff]
    %v1410 = vld [vmem:[#allocation8 + $0x17c] sm:$0xf]
    %v1411 = vld [vmem:[#allocation8 + $0x180] sm:$0xff]
    %v1412 = vld [vmem:[#allocation8 + $0x188] sm:$0xf]
    %v1413 = vld [vmem:[#allocation8 + $0x18c] sm:$0xff]
    %v1414 = vld [vmem:[#allocation8 + $0x194] sm:$0xf]
    %v1415 = vld [vmem:[#allocation8 + $0x198] sm:$0xff]
    %v1416 = vld [vmem:[#allocation8 + $0x1a0] sm:$0xf]
    %v1417 = vld [vmem:[#allocation8 + $0x1a4] sm:$0xff]
    %v1418 = vld [vmem:[#allocation8 + $0x1ac] sm:$0xf]
    %v1419 = vld [vmem:[#allocation8 + $0x1b0] sm:$0xff]
    %v1420 = vld [vmem:[#allocation8 + $0x1b8] sm:$0xf]
    %v1421 = vld [vmem:[#allocation8 + $0x1bc] sm:$0xff]
    %v1422 = vld [vmem:[#allocation8 + $0x1c4] sm:$0xf]
    %v1423 = vld [vmem:[#allocation8 + $0x1c8] sm:$0xff]
    %v1424 = vld [vmem:[#allocation8 + $0x1d0] sm:$0xf]
    %v1425 = vld [vmem:[#allocation8 + $0x1d4] sm:$0xff]
    %v1426 = vld [vmem:[#allocation8 + $0x1dc] sm:$0xf]
    %v1427 = vld [vmem:[#allocation8 + $0x1e0] sm:$0xff]
    %v1428 = vld [vmem:[#allocation8 + $0x1e8] sm:$0xf]
    %v1429 = vld [vmem:[#allocation8 + $0x1ec] sm:$0xff]
    %v1430 = vld [vmem:[#allocation8 + $0x1f4] sm:$0xf]
    %v1431 = vld [vmem:[#allocation8 + $0x1f8] sm:$0xff]
    %v1432 = vld [vmem:[#allocation8 + $0x200] sm:$0xf]
    %v1433 = vld [vmem:[#allocation8 + $0x204] sm:$0xff]
    %v1434 = vld [vmem:[#allocation8 + $0x20c] sm:$0xf]
    %v1435 = vld [vmem:[#allocation8 + $0x210] sm:$0xff]
    %v1436 = vld [vmem:[#allocation8 + $0x218] sm:$0xf]
    %v1437 = vld [vmem:[#allocation8 + $0x21c] sm:$0xff]
    %v1438 = vld [vmem:[#allocation8 + $0x224] sm:$0xf]
    %v1439 = vld [vmem:[#allocation8 + $0x228] sm:$0xff]
    %v1440 = vld [vmem:[#allocation8 + $0x230] sm:$0xf]
    %v1441 = vld [vmem:[#allocation8 + $0x234] sm:$0xff]
    %v1442 = vld [vmem:[#allocation8 + $0x23c] sm:$0xf]
    %v1443 = vld [vmem:[#allocation8 + $0x240] sm:$0xff]
    %v1444 = vld [vmem:[#allocation8 + $0x248] sm:$0xf]
    %v1445 = vld [vmem:[#allocation8 + $0x24c] sm:$0xff]
    %v1446 = vld [vmem:[#allocation8 + $0x254] sm:$0xf]
    %v1447 = vld [vmem:[#allocation8 + $0x258] sm:$0xff]
    %v1448 = vld [vmem:[#allocation8 + $0x260] sm:$0xf]
    %v1449 = vld [vmem:[#allocation8 + $0x264] sm:$0xff]
    %v1450 = vld [vmem:[#allocation8 + $0x26c] sm:$0xf]
    %v1451 = vld [vmem:[#allocation8 + $0x270] sm:$0xff]
    %v1452 = vld [vmem:[#allocation8 + $0x278] sm:$0xf]
    %v1453 = vld [vmem:[#allocation8 + $0x27c] sm:$0xff]
    %v1454 = vld [vmem:[#allocation8 + $0x284] sm:$0xf]
    %v1455 = vld [vmem:[#allocation8 + $0x288] sm:$0xff]
    %v1456 = vld [vmem:[#allocation8 + $0x290] sm:$0xf]
    %v1457 = vld [vmem:[#allocation8 + $0x294] sm:$0xff]
    %v1458 = vld [vmem:[#allocation8 + $0x29c] sm:$0xf]
    %v1459 = vld [vmem:[#allocation8 + $0x2a0] sm:$0xff]
    %v1460 = vld [vmem:[#allocation8 + $0x2a8] sm:$0xf]
    %v1461 = vld [vmem:[#allocation8 + $0x2ac] sm:$0xff]
    %v1462 = vld [vmem:[#allocation8 + $0x2b4] sm:$0xf]
    %v1463 = vld [vmem:[#allocation8 + $0x2b8] sm:$0xff]
    %v1464 = vld [vmem:[#allocation8 + $0x2c0] sm:$0xf]
    %v1465 = vld [vmem:[#allocation8 + $0x2c4] sm:$0xff]
    %v1466 = vld [vmem:[#allocation8 + $0x2cc] sm:$0xf]
    %v1467 = vld [vmem:[#allocation8 + $0x2d0] sm:$0xff]
    %v1468 = vld [vmem:[#allocation8 + $0x2d8] sm:$0xf]
    %v1469 = vld [vmem:[#allocation8 + $0x2dc] sm:$0xff]
    %v1470 = vld [vmem:[#allocation8 + $0x2e4] sm:$0xf]
    %v1471 = vld [vmem:[#allocation8 + $0x2e8] sm:$0xff]
    %v1472 = vld [vmem:[#allocation8 + $0x2f0] sm:$0xf]
    %v1473 = vld [vmem:[#allocation8 + $0x2f4] sm:$0xff]
    %v1474 = vld [vmem:[#allocation8 + $0x2fc] sm:$0xf]
    %v1475 = vld [vmem:[#allocation8 + $0x300] sm:$0xff]
    %v1476 = vld [vmem:[#allocation8 + $0x308] sm:$0xf]
    %v1477 = vld [vmem:[#allocation8 + $0x30c] sm:$0xff]
    %v1478 = vld [vmem:[#allocation8 + $0x314] sm:$0xf]
    %v1479 = vld [vmem:[#allocation8 + $0x318] sm:$0xff]
    %v1480 = vld [vmem:[#allocation8 + $0x320] sm:$0xf]
    %v1481 = vld [vmem:[#allocation8 + $0x324] sm:$0xff]
    %v1482 = vld [vmem:[#allocation8 + $0x32c] sm:$0xf]
    %v1483 = vld [vmem:[#allocation8 + $0x330] sm:$0xff]
    %v1484 = vld [vmem:[#allocation8 + $0x338] sm:$0xf]
    %v1485 = vld [vmem:[#allocation8 + $0x33c] sm:$0xff]
    %v1486 = vld [vmem:[#allocation8 + $0x344] sm:$0xf]
    %v1487 = vld [vmem:[#allocation8 + $0x348] sm:$0xff]
    %v1488 = vld [vmem:[#allocation8 + $0x350] sm:$0xf]
    %v1489 = vld [vmem:[#allocation8 + $0x354] sm:$0xff]
    %v1490 = vld [vmem:[#allocation8 + $0x35c] sm:$0xf]
    %v1491 = vld [vmem:[#allocation8 + $0x360] sm:$0xff]
    %v1492 = vld [vmem:[#allocation8 + $0x368] sm:$0xf]
    %v1493 = vld [vmem:[#allocation8 + $0x36c] sm:$0xff]
    %v1494 = vld [vmem:[#allocation8 + $0x374] sm:$0xf]
    %v1495 = vld [vmem:[#allocation8 + $0x378] sm:$0xff]
    %v1496 = vld [vmem:[#allocation8 + $0x380] sm:$0xf]
    %v1497 = vld [vmem:[#allocation8 + $0x384] sm:$0xff]
    %v1498 = vld [vmem:[#allocation8 + $0x38c] sm:$0xf]
    %v1499 = vld [vmem:[#allocation8 + $0x390] sm:$0xff]
    %v1500 = vld [vmem:[#allocation8 + $0x398] sm:$0xf]
    %v1501 = vld [vmem:[#allocation8 + $0x39c] sm:$0xff]
    %v1502 = vld [vmem:[#allocation8 + $0x3a4] sm:$0xf]
    %v1503 = vld [vmem:[#allocation8 + $0x3a8] sm:$0xff]
    %v1504 = vld [vmem:[#allocation8 + $0x3b0] sm:$0xf]
    %v1505 = vld [vmem:[#allocation8 + $0x3b4] sm:$0xff]
    %v1506 = vld [vmem:[#allocation8 + $0x3bc] sm:$0xf]
    %v1507 = vld [vmem:[#allocation8 + $0x3c0] sm:$0xff]
    %v1508 = vld [vmem:[#allocation8 + $0x3c8] sm:$0xf]
    %v1509 = vld [vmem:[#allocation8 + $0x3cc] sm:$0xff]
    %v1510 = vld [vmem:[#allocation8 + $0x3d4] sm:$0xf]
    %v1511 = vld [vmem:[#allocation8 + $0x3d8] sm:$0xff]
    %v1512 = vld [vmem:[#allocation8 + $0x3e0] sm:$0xf]
    %v1513 = vld [vmem:[#allocation8 + $0x3e4] sm:$0xff]
    %v1514 = vld [vmem:[#allocation8 + $0x3ec] sm:$0xf]
    %v1515 = vld [vmem:[#allocation8 + $0x3f0] sm:$0xff]
    %v1516 = vld [vmem:[#allocation8 + $0x3f8] sm:$0xf]
    %v1517 = vld [vmem:[#allocation8 + $0x3fc] sm:$0xff]
    %v1518 = vld [vmem:[#allocation8 + $0x404] sm:$0xf]
    %v1519 = vld [vmem:[#allocation8 + $0x408] sm:$0xff]
    %v1520 = vld [vmem:[#allocation8 + $0x410] sm:$0xf]
    %v1521 = vld [vmem:[#allocation8 + $0x414] sm:$0xff]
    %v1522 = vld [vmem:[#allocation8 + $0x41c] sm:$0xf]
    %v1523 = vld [vmem:[#allocation8 + $0x420] sm:$0xff]
    %v1524 = vld [vmem:[#allocation8 + $0x428] sm:$0xf]
    %v1525 = vld [vmem:[#allocation8 + $0x42c] sm:$0xff]
    %v1526 = vld [vmem:[#allocation8 + $0x434] sm:$0xf]
    %v1527 = vld [vmem:[#allocation8 + $0x438] sm:$0xff]
    %v1528 = vld [vmem:[#allocation8 + $0x440] sm:$0xf]
    %v1529 = vld [vmem:[#allocation8 + $0x444] sm:$0xff]
    %v1530 = vld [vmem:[#allocation8 + $0x44c] sm:$0xf]
    %v1531 = vld [vmem:[#allocation8 + $0x450] sm:$0xff]
    %v1532 = vld [vmem:[#allocation8 + $0x458] sm:$0xf]
    %v1533 = vld [vmem:[#allocation8 + $0x45c] sm:$0xff]
    %v1534 = vld [vmem:[#allocation8 + $0x464] sm:$0xf]
    %v1535 = vld [vmem:[#allocation8 + $0x468] sm:$0xff]
    %v1536 = vld [vmem:[#allocation8 + $0x470] sm:$0xf]
    %v1537 = vld [vmem:[#allocation8 + $0x474] sm:$0xff]
    %v1538 = vld [vmem:[#allocation8 + $0x47c] sm:$0xf]
    %v1539 = vld [vmem:[#allocation8 + $0x480] sm:$0xff]
    %v1540 = vld [vmem:[#allocation8 + $0x488] sm:$0xf]
    %v1541 = vld [vmem:[#allocation8 + $0x48c] sm:$0xff]
    %v1542 = vld [vmem:[#allocation8 + $0x494] sm:$0xf]
    %v1543 = vld [vmem:[#allocation8 + $0x498] sm:$0xff]
    %v1544 = vld [vmem:[#allocation8 + $0x4a0] sm:$0xf]
    %v1545 = vld [vmem:[#allocation8 + $0x4a4] sm:$0xff]
    %v1546 = vld [vmem:[#allocation8 + $0x4ac] sm:$0xf]
    %v1547 = vld [vmem:[#allocation8 + $0x4b0] sm:$0xff]
    %v1548 = vld [vmem:[#allocation8 + $0x4b8] sm:$0xf]
    %v1549 = vld [vmem:[#allocation8 + $0x4bc] sm:$0xff]
    %v1550 = vld [vmem:[#allocation8 + $0x4c4] sm:$0xf]
    %v1551 = vld [vmem:[#allocation8 + $0x4c8] sm:$0xff]
    %v1552 = vld [vmem:[#allocation8 + $0x4d0] sm:$0xf]
    %v1553 = vld [vmem:[#allocation8 + $0x4d4] sm:$0xff]
    %v1554 = vld [vmem:[#allocation8 + $0x4dc] sm:$0xf]
    %v1555 = vld [vmem:[#allocation8 + $0x4e0] sm:$0xff]
    %v1556 = vld [vmem:[#allocation8 + $0x4e8] sm:$0xf]
    %v1557 = vld [vmem:[#allocation8 + $0x4ec] sm:$0xff]
    %v1558 = vld [vmem:[#allocation8 + $0x4f4] sm:$0xf]
    %v1559 = vld [vmem:[#allocation8 + $0x4f8] sm:$0xff]
    %v1560 = vld [vmem:[#allocation8 + $0x500] sm:$0xf]
    %v1561 = vld [vmem:[#allocation8 + $0x504] sm:$0xff]
    %v1562 = vld [vmem:[#allocation8 + $0x50c] sm:$0xf]
    %v1563 = vld [vmem:[#allocation8 + $0x510] sm:$0xff]
    %v1564 = vld [vmem:[#allocation8 + $0x518] sm:$0xf]
    %v1565 = vld [vmem:[#allocation8 + $0x51c] sm:$0xff]
    %v1566 = vld [vmem:[#allocation8 + $0x524] sm:$0xf]
    %v1567 = vld [vmem:[#allocation8 + $0x528] sm:$0xff]
    %v1568 = vld [vmem:[#allocation8 + $0x530] sm:$0xf]
    %v1569 = vld [vmem:[#allocation8 + $0x534] sm:$0xff]
    %v1570 = vld [vmem:[#allocation8 + $0x53c] sm:$0xf]
    %v1571 = vld [vmem:[#allocation8 + $0x540] sm:$0xff]
    %v1572 = vld [vmem:[#allocation8 + $0x548] sm:$0xf]
    %v1573 = vld [vmem:[#allocation8 + $0x54c] sm:$0xff]
    %v1574 = vld [vmem:[#allocation8 + $0x554] sm:$0xf]
    %v1575 = vld [vmem:[#allocation8 + $0x558] sm:$0xff]
    %v1576 = vld [vmem:[#allocation8 + $0x560] sm:$0xf]
    %v1577 = vld [vmem:[#allocation8 + $0x564] sm:$0xff]
    %v1578 = vld [vmem:[#allocation8 + $0x56c] sm:$0xf]
    %v1579 = vld [vmem:[#allocation8 + $0x570] sm:$0xff]
    %v1580 = vld [vmem:[#allocation8 + $0x578] sm:$0xf]
    %v1581 = vld [vmem:[#allocation8 + $0x57c] sm:$0xff]
    %v1582 = vld [vmem:[#allocation8 + $0x584] sm:$0xf]
    %v1583 = vld [vmem:[#allocation8 + $0x588] sm:$0xff]
    %v1584 = vld [vmem:[#allocation8 + $0x590] sm:$0xf]
    %v1585 = vld [vmem:[#allocation8 + $0x594] sm:$0xff]
    %v1586 = vld [vmem:[#allocation8 + $0x59c] sm:$0xf]
    %v1587 = vld [vmem:[#allocation8 + $0x5a0] sm:$0xff]
    %v1588 = vld [vmem:[#allocation8 + $0x5a8] sm:$0xf]
    %v1589 = vld [vmem:[#allocation8 + $0x5ac] sm:$0xff]
    %v1590 = vld [vmem:[#allocation8 + $0x5b4] sm:$0xf]
    %v1591 = vld [vmem:[#allocation8 + $0x5b8] sm:$0xff]
    %v1592 = vld [vmem:[#allocation8 + $0x5c0] sm:$0xf]
    %v1593 = vld [vmem:[#allocation8 + $0x5c4] sm:$0xff]
    %v1594 = vld [vmem:[#allocation8 + $0x5cc] sm:$0xf]
    %v1595 = vld [vmem:[#allocation8 + $0x5d0] sm:$0xff]
    %v1596 = vld [vmem:[#allocation8 + $0x5d8] sm:$0xf]
    %v1597 = vld [vmem:[#allocation8 + $0x5dc] sm:$0xff]
    %v1598 = vld [vmem:[#allocation8 + $0x5e4] sm:$0xf]
    %v1599 = vld [vmem:[#allocation8 + $0x5e8] sm:$0xff]
    %v1600 = vld [vmem:[#allocation8 + $0x5f0] sm:$0xf]
    %v1601 = vld [vmem:[#allocation8 + $0x5f4] sm:$0xff]
    %v1602 = vld [vmem:[#allocation8 + $0x5fc] sm:$0xf]
    %v1603 = vld [vmem:[#allocation10] sm:$0x7]
    %v1605 = vlaneseq
    %v1606 = vshrl.u32 %v1605, 7
    %v1607 = vsub.s32 0, %v1606
    %v1608 = vrot.slane %v1603, %v1607
    %v1609 = vlaneseq
    %v1610 = vshrl.u32 %v1609, 7
    %v1611 = vsub.s32 1, %v1610
    %v1612 = vrot.slane %v1603, %v1611
    %v1613 = vlaneseq
    %v1614 = vshrl.u32 %v1613, 7
    %v1615 = vsub.s32 2, %v1614
    %v1616 = vrot.slane %v1603, %v1615
    %v1876 = vunpack.c.l.b16 %v1347
    %v1877 = vunpack.c.h.b16 %v1347
    %v1878 = vunpack.c.l.b16 %v1348
    %v1879 = vunpack.c.l.b16 %v1349
    %v1880 = vunpack.c.h.b16 %v1349
    %v1881 = vunpack.c.l.b16 %v1350
    %v1882 = vunpack.c.l.b16 %v1351
    %v1883 = vunpack.c.h.b16 %v1351
    %v1884 = vunpack.c.l.b16 %v1352
    %v1885 = vunpack.c.l.b16 %v1353
    %v1886 = vunpack.c.h.b16 %v1353
    %v1887 = vunpack.c.l.b16 %v1354
    %v1888 = vunpack.c.l.b16 %v1355
    %v1889 = vunpack.c.h.b16 %v1355
    %v1890 = vunpack.c.l.b16 %v1356
    %v1891 = vunpack.c.l.b16 %v1357
    %v1892 = vunpack.c.h.b16 %v1357
    %v1893 = vunpack.c.l.b16 %v1358
    %v1894 = vunpack.c.l.b16 %v1359
    %v1895 = vunpack.c.h.b16 %v1359
    %v1896 = vunpack.c.l.b16 %v1360
    %v1897 = vunpack.c.l.b16 %v1361
    %v1898 = vunpack.c.h.b16 %v1361
    %v1899 = vunpack.c.l.b16 %v1362
    %v1900 = vunpack.c.l.b16 %v1363
    %v1901 = vunpack.c.h.b16 %v1363
    %v1902 = vunpack.c.l.b16 %v1364
    %v1903 = vunpack.c.l.b16 %v1365
    %v1904 = vunpack.c.h.b16 %v1365
    %v1905 = vunpack.c.l.b16 %v1366
    %v1906 = vunpack.c.l.b16 %v1367
    %v1907 = vunpack.c.h.b16 %v1367
    %v1908 = vunpack.c.l.b16 %v1368
    %v1909 = vunpack.c.l.b16 %v1369
    %v1910 = vunpack.c.h.b16 %v1369
    %v1911 = vunpack.c.l.b16 %v1370
    %v1912 = vunpack.c.l.b16 %v1371
    %v1913 = vunpack.c.h.b16 %v1371
    %v1914 = vunpack.c.l.b16 %v1372
    %v1915 = vunpack.c.l.b16 %v1373
    %v1916 = vunpack.c.h.b16 %v1373
    %v1917 = vunpack.c.l.b16 %v1374
    %v1918 = vunpack.c.l.b16 %v1375
    %v1919 = vunpack.c.h.b16 %v1375
    %v1920 = vunpack.c.l.b16 %v1376
    %v1921 = vunpack.c.l.b16 %v1377
    %v1922 = vunpack.c.h.b16 %v1377
    %v1923 = vunpack.c.l.b16 %v1378
    %v1924 = vunpack.c.l.b16 %v1379
    %v1925 = vunpack.c.h.b16 %v1379
    %v1926 = vunpack.c.l.b16 %v1380
    %v1927 = vunpack.c.l.b16 %v1381
    %v1928 = vunpack.c.h.b16 %v1381
    %v1929 = vunpack.c.l.b16 %v1382
    %v1930 = vunpack.c.l.b16 %v1383
    %v1931 = vunpack.c.h.b16 %v1383
    %v1932 = vunpack.c.l.b16 %v1384
    %v1933 = vunpack.c.l.b16 %v1385
    %v1934 = vunpack.c.h.b16 %v1385
    %v1935 = vunpack.c.l.b16 %v1386
    %v1936 = vunpack.c.l.b16 %v1387
    %v1937 = vunpack.c.h.b16 %v1387
    %v1938 = vunpack.c.l.b16 %v1388
    %v1939 = vunpack.c.l.b16 %v1389
    %v1940 = vunpack.c.h.b16 %v1389
    %v1941 = vunpack.c.l.b16 %v1390
    %v1942 = vunpack.c.l.b16 %v1391
    %v1943 = vunpack.c.h.b16 %v1391
    %v1944 = vunpack.c.l.b16 %v1392
    %v1945 = vunpack.c.l.b16 %v1393
    %v1946 = vunpack.c.h.b16 %v1393
    %v1947 = vunpack.c.l.b16 %v1394
    %v1948 = vunpack.c.l.b16 %v1395
    %v1949 = vunpack.c.h.b16 %v1395
    %v1950 = vunpack.c.l.b16 %v1396
    %v1951 = vunpack.c.l.b16 %v1397
    %v1952 = vunpack.c.h.b16 %v1397
    %v1953 = vunpack.c.l.b16 %v1398
    %v1954 = vunpack.c.l.b16 %v1399
    %v1955 = vunpack.c.h.b16 %v1399
    %v1956 = vunpack.c.l.b16 %v1400
    %v1957 = vunpack.c.l.b16 %v1401
    %v1958 = vunpack.c.h.b16 %v1401
    %v1959 = vunpack.c.l.b16 %v1402
    %v1960 = vunpack.c.l.b16 %v1403
    %v1961 = vunpack.c.h.b16 %v1403
    %v1962 = vunpack.c.l.b16 %v1404
    %v1963 = vunpack.c.l.b16 %v1405
    %v1964 = vunpack.c.h.b16 %v1405
    %v1965 = vunpack.c.l.b16 %v1406
    %v1966 = vunpack.c.l.b16 %v1407
    %v1967 = vunpack.c.h.b16 %v1407
    %v1968 = vunpack.c.l.b16 %v1408
    %v1969 = vunpack.c.l.b16 %v1409
    %v1970 = vunpack.c.h.b16 %v1409
    %v1971 = vunpack.c.l.b16 %v1410
    %v1972 = vunpack.c.l.b16 %v1411
    %v1973 = vunpack.c.h.b16 %v1411
    %v1974 = vunpack.c.l.b16 %v1412
    %v1975 = vunpack.c.l.b16 %v1413
    %v1976 = vunpack.c.h.b16 %v1413
    %v1977 = vunpack.c.l.b16 %v1414
    %v1978 = vunpack.c.l.b16 %v1415
    %v1979 = vunpack.c.h.b16 %v1415
    %v1980 = vunpack.c.l.b16 %v1416
    %v1981 = vunpack.c.l.b16 %v1417
    %v1982 = vunpack.c.h.b16 %v1417
    %v1983 = vunpack.c.l.b16 %v1418
    %v1984 = vunpack.c.l.b16 %v1419
    %v1985 = vunpack.c.h.b16 %v1419
    %v1986 = vunpack.c.l.b16 %v1420
    %v1987 = vunpack.c.l.b16 %v1421
    %v1988 = vunpack.c.h.b16 %v1421
    %v1989 = vunpack.c.l.b16 %v1422
    %v1990 = vunpack.c.l.b16 %v1423
    %v1991 = vunpack.c.h.b16 %v1423
    %v1992 = vunpack.c.l.b16 %v1424
    %v1993 = vunpack.c.l.b16 %v1425
    %v1994 = vunpack.c.h.b16 %v1425
    %v1995 = vunpack.c.l.b16 %v1426
    %v1996 = vunpack.c.l.b16 %v1427
    %v1997 = vunpack.c.h.b16 %v1427
    %v1998 = vunpack.c.l.b16 %v1428
    %v1999 = vunpack.c.l.b16 %v1429
    %v2000 = vunpack.c.h.b16 %v1429
    %v2001 = vunpack.c.l.b16 %v1430
    %v2002 = vunpack.c.l.b16 %v1431
    %v2003 = vunpack.c.h.b16 %v1431
    %v2004 = vunpack.c.l.b16 %v1432
    %v2005 = vunpack.c.l.b16 %v1433
    %v2006 = vunpack.c.h.b16 %v1433
    %v2007 = vunpack.c.l.b16 %v1434
    %v2008 = vunpack.c.l.b16 %v1435
    %v2009 = vunpack.c.h.b16 %v1435
    %v2010 = vunpack.c.l.b16 %v1436
    %v2011 = vunpack.c.l.b16 %v1437
    %v2012 = vunpack.c.h.b16 %v1437
    %v2013 = vunpack.c.l.b16 %v1438
    %v2014 = vunpack.c.l.b16 %v1439
    %v2015 = vunpack.c.h.b16 %v1439
    %v2016 = vunpack.c.l.b16 %v1440
    %v2017 = vunpack.c.l.b16 %v1441
    %v2018 = vunpack.c.h.b16 %v1441
    %v2019 = vunpack.c.l.b16 %v1442
    %v2020 = vunpack.c.l.b16 %v1443
    %v2021 = vunpack.c.h.b16 %v1443
    %v2022 = vunpack.c.l.b16 %v1444
    %v2023 = vunpack.c.l.b16 %v1445
    %v2024 = vunpack.c.h.b16 %v1445
    %v2025 = vunpack.c.l.b16 %v1446
    %v2026 = vunpack.c.l.b16 %v1447
    %v2027 = vunpack.c.h.b16 %v1447
    %v2028 = vunpack.c.l.b16 %v1448
    %v2029 = vunpack.c.l.b16 %v1449
    %v2030 = vunpack.c.h.b16 %v1449
    %v2031 = vunpack.c.l.b16 %v1450
    %v2032 = vunpack.c.l.b16 %v1451
    %v2033 = vunpack.c.h.b16 %v1451
    %v2034 = vunpack.c.l.b16 %v1452
    %v2035 = vunpack.c.l.b16 %v1453
    %v2036 = vunpack.c.h.b16 %v1453
    %v2037 = vunpack.c.l.b16 %v1454
    %v2038 = vunpack.c.l.b16 %v1455
    %v2039 = vunpack.c.h.b16 %v1455
    %v2040 = vunpack.c.l.b16 %v1456
    %v2041 = vunpack.c.l.b16 %v1457
    %v2042 = vunpack.c.h.b16 %v1457
    %v2043 = vunpack.c.l.b16 %v1458
    %v2044 = vunpack.c.l.b16 %v1459
    %v2045 = vunpack.c.h.b16 %v1459
    %v2046 = vunpack.c.l.b16 %v1460
    %v2047 = vunpack.c.l.b16 %v1461
    %v2048 = vunpack.c.h.b16 %v1461
    %v2049 = vunpack.c.l.b16 %v1462
    %v2050 = vunpack.c.l.b16 %v1463
    %v2051 = vunpack.c.h.b16 %v1463
    %v2052 = vunpack.c.l.b16 %v1464
    %v2053 = vunpack.c.l.b16 %v1465
    %v2054 = vunpack.c.h.b16 %v1465
    %v2055 = vunpack.c.l.b16 %v1466
    %v2056 = vunpack.c.l.b16 %v1467
    %v2057 = vunpack.c.h.b16 %v1467
    %v2058 = vunpack.c.l.b16 %v1468
    %v2059 = vunpack.c.l.b16 %v1469
    %v2060 = vunpack.c.h.b16 %v1469
    %v2061 = vunpack.c.l.b16 %v1470
    %v2062 = vunpack.c.l.b16 %v1471
    %v2063 = vunpack.c.h.b16 %v1471
    %v2064 = vunpack.c.l.b16 %v1472
    %v2065 = vunpack.c.l.b16 %v1473
    %v2066 = vunpack.c.h.b16 %v1473
    %v2067 = vunpack.c.l.b16 %v1474
    %v2068 = vunpack.c.l.b16 %v1475
    %v2069 = vunpack.c.h.b16 %v1475
    %v2070 = vunpack.c.l.b16 %v1476
    %v2071 = vunpack.c.l.b16 %v1477
    %v2072 = vunpack.c.h.b16 %v1477
    %v2073 = vunpack.c.l.b16 %v1478
    %v2074 = vunpack.c.l.b16 %v1479
    %v2075 = vunpack.c.h.b16 %v1479
    %v2076 = vunpack.c.l.b16 %v1480
    %v2077 = vunpack.c.l.b16 %v1481
    %v2078 = vunpack.c.h.b16 %v1481
    %v2079 = vunpack.c.l.b16 %v1482
    %v2080 = vunpack.c.l.b16 %v1483
    %v2081 = vunpack.c.h.b16 %v1483
    %v2082 = vunpack.c.l.b16 %v1484
    %v2083 = vunpack.c.l.b16 %v1485
    %v2084 = vunpack.c.h.b16 %v1485
    %v2085 = vunpack.c.l.b16 %v1486
    %v2086 = vunpack.c.l.b16 %v1487
    %v2087 = vunpack.c.h.b16 %v1487
    %v2088 = vunpack.c.l.b16 %v1488
    %v2089 = vunpack.c.l.b16 %v1489
    %v2090 = vunpack.c.h.b16 %v1489
    %v2091 = vunpack.c.l.b16 %v1490
    %v2092 = vunpack.c.l.b16 %v1491
    %v2093 = vunpack.c.h.b16 %v1491
    %v2094 = vunpack.c.l.b16 %v1492
    %v2095 = vunpack.c.l.b16 %v1493
    %v2096 = vunpack.c.h.b16 %v1493
    %v2097 = vunpack.c.l.b16 %v1494
    %v2098 = vunpack.c.l.b16 %v1495
    %v2099 = vunpack.c.h.b16 %v1495
    %v2100 = vunpack.c.l.b16 %v1496
    %v2101 = vunpack.c.l.b16 %v1497
    %v2102 = vunpack.c.h.b16 %v1497
    %v2103 = vunpack.c.l.b16 %v1498
    %v2104 = vunpack.c.l.b16 %v1499
    %v2105 = vunpack.c.h.b16 %v1499
    %v2106 = vunpack.c.l.b16 %v1500
    %v2107 = vunpack.c.l.b16 %v1501
    %v2108 = vunpack.c.h.b16 %v1501
    %v2109 = vunpack.c.l.b16 %v1502
    %v2110 = vunpack.c.l.b16 %v1503
    %v2111 = vunpack.c.h.b16 %v1503
    %v2112 = vunpack.c.l.b16 %v1504
    %v2113 = vunpack.c.l.b16 %v1505
    %v2114 = vunpack.c.h.b16 %v1505
    %v2115 = vunpack.c.l.b16 %v1506
    %v2116 = vunpack.c.l.b16 %v1507
    %v2117 = vunpack.c.h.b16 %v1507
    %v2118 = vunpack.c.l.b16 %v1508
    %v2119 = vunpack.c.l.b16 %v1509
    %v2120 = vunpack.c.h.b16 %v1509
    %v2121 = vunpack.c.l.b16 %v1510
    %v2122 = vunpack.c.l.b16 %v1511
    %v2123 = vunpack.c.h.b16 %v1511
    %v2124 = vunpack.c.l.b16 %v1512
    %v2125 = vunpack.c.l.b16 %v1513
    %v2126 = vunpack.c.h.b16 %v1513
    %v2127 = vunpack.c.l.b16 %v1514
    %v2128 = vunpack.c.l.b16 %v1515
    %v2129 = vunpack.c.h.b16 %v1515
    %v2130 = vunpack.c.l.b16 %v1516
    %v2131 = vunpack.c.l.b16 %v1517
    %v2132 = vunpack.c.h.b16 %v1517
    %v2133 = vunpack.c.l.b16 %v1518
    %v2134 = vunpack.c.l.b16 %v1519
    %v2135 = vunpack.c.h.b16 %v1519
    %v2136 = vunpack.c.l.b16 %v1520
    %v2137 = vunpack.c.l.b16 %v1521
    %v2138 = vunpack.c.h.b16 %v1521
    %v2139 = vunpack.c.l.b16 %v1522
    %v2140 = vunpack.c.l.b16 %v1523
    %v2141 = vunpack.c.h.b16 %v1523
    %v2142 = vunpack.c.l.b16 %v1524
    %v2143 = vunpack.c.l.b16 %v1525
    %v2144 = vunpack.c.h.b16 %v1525
    %v2145 = vunpack.c.l.b16 %v1526
    %v2146 = vunpack.c.l.b16 %v1527
    %v2147 = vunpack.c.h.b16 %v1527
    %v2148 = vunpack.c.l.b16 %v1528
    %v2149 = vunpack.c.l.b16 %v1529
    %v2150 = vunpack.c.h.b16 %v1529
    %v2151 = vunpack.c.l.b16 %v1530
    %v2152 = vunpack.c.l.b16 %v1531
    %v2153 = vunpack.c.h.b16 %v1531
    %v2154 = vunpack.c.l.b16 %v1532
    %v2155 = vunpack.c.l.b16 %v1533
    %v2156 = vunpack.c.h.b16 %v1533
    %v2157 = vunpack.c.l.b16 %v1534
    %v2158 = vunpack.c.l.b16 %v1535
    %v2159 = vunpack.c.h.b16 %v1535
    %v2160 = vunpack.c.l.b16 %v1536
    %v2161 = vunpack.c.l.b16 %v1537
    %v2162 = vunpack.c.h.b16 %v1537
    %v2163 = vunpack.c.l.b16 %v1538
    %v2164 = vunpack.c.l.b16 %v1539
    %v2165 = vunpack.c.h.b16 %v1539
    %v2166 = vunpack.c.l.b16 %v1540
    %v2167 = vunpack.c.l.b16 %v1541
    %v2168 = vunpack.c.h.b16 %v1541
    %v2169 = vunpack.c.l.b16 %v1542
    %v2170 = vunpack.c.l.b16 %v1543
    %v2171 = vunpack.c.h.b16 %v1543
    %v2172 = vunpack.c.l.b16 %v1544
    %v2173 = vunpack.c.l.b16 %v1545
    %v2174 = vunpack.c.h.b16 %v1545
    %v2175 = vunpack.c.l.b16 %v1546
    %v2176 = vunpack.c.l.b16 %v1547
    %v2177 = vunpack.c.h.b16 %v1547
    %v2178 = vunpack.c.l.b16 %v1548
    %v2179 = vunpack.c.l.b16 %v1549
    %v2180 = vunpack.c.h.b16 %v1549
    %v2181 = vunpack.c.l.b16 %v1550
    %v2182 = vunpack.c.l.b16 %v1551
    %v2183 = vunpack.c.h.b16 %v1551
    %v2184 = vunpack.c.l.b16 %v1552
    %v2185 = vunpack.c.l.b16 %v1553
    %v2186 = vunpack.c.h.b16 %v1553
    %v2187 = vunpack.c.l.b16 %v1554
    %v2188 = vunpack.c.l.b16 %v1555
    %v2189 = vunpack.c.h.b16 %v1555
    %v2190 = vunpack.c.l.b16 %v1556
    %v2191 = vunpack.c.l.b16 %v1557
    %v2192 = vunpack.c.h.b16 %v1557
    %v2193 = vunpack.c.l.b16 %v1558
    %v2194 = vunpack.c.l.b16 %v1559
    %v2195 = vunpack.c.h.b16 %v1559
    %v2196 = vunpack.c.l.b16 %v1560
    %v2197 = vunpack.c.l.b16 %v1561
    %v2198 = vunpack.c.h.b16 %v1561
    %v2199 = vunpack.c.l.b16 %v1562
    %v2200 = vunpack.c.l.b16 %v1563
    %v2201 = vunpack.c.h.b16 %v1563
    %v2202 = vunpack.c.l.b16 %v1564
    %v2203 = vunpack.c.l.b16 %v1565
    %v2204 = vunpack.c.h.b16 %v1565
    %v2205 = vunpack.c.l.b16 %v1566
    %v2206 = vunpack.c.l.b16 %v1567
    %v2207 = vunpack.c.h.b16 %v1567
    %v2208 = vunpack.c.l.b16 %v1568
    %v2209 = vunpack.c.l.b16 %v1569
    %v2210 = vunpack.c.h.b16 %v1569
    %v2211 = vunpack.c.l.b16 %v1570
    %v2212 = vunpack.c.l.b16 %v1571
    %v2213 = vunpack.c.h.b16 %v1571
    %v2214 = vunpack.c.l.b16 %v1572
    %v2215 = vunpack.c.l.b16 %v1573
    %v2216 = vunpack.c.h.b16 %v1573
    %v2217 = vunpack.c.l.b16 %v1574
    %v2218 = vunpack.c.l.b16 %v1575
    %v2219 = vunpack.c.h.b16 %v1575
    %v2220 = vunpack.c.l.b16 %v1576
    %v2221 = vunpack.c.l.b16 %v1577
    %v2222 = vunpack.c.h.b16 %v1577
    %v2223 = vunpack.c.l.b16 %v1578
    %v2224 = vunpack.c.l.b16 %v1579
    %v2225 = vunpack.c.h.b16 %v1579
    %v2226 = vunpack.c.l.b16 %v1580
    %v2227 = vunpack.c.l.b16 %v1581
    %v2228 = vunpack.c.h.b16 %v1581
    %v2229 = vunpack.c.l.b16 %v1582
    %v2230 = vunpack.c.l.b16 %v1583
    %v2231 = vunpack.c.h.b16 %v1583
    %v2232 = vunpack.c.l.b16 %v1584
    %v2233 = vunpack.c.l.b16 %v1585
    %v2234 = vunpack.c.h.b16 %v1585
    %v2235 = vunpack.c.l.b16 %v1586
    %v2236 = vunpack.c.l.b16 %v1587
    %v2237 = vunpack.c.h.b16 %v1587
    %v2238 = vunpack.c.l.b16 %v1588
    %v2239 = vunpack.c.l.b16 %v1589
    %v2240 = vunpack.c.h.b16 %v1589
    %v2241 = vunpack.c.l.b16 %v1590
    %v2242 = vunpack.c.l.b16 %v1591
    %v2243 = vunpack.c.h.b16 %v1591
    %v2244 = vunpack.c.l.b16 %v1592
    %v2245 = vunpack.c.l.b16 %v1593
    %v2246 = vunpack.c.h.b16 %v1593
    %v2247 = vunpack.c.l.b16 %v1594
    %v2248 = vunpack.c.l.b16 %v1595
    %v2249 = vunpack.c.h.b16 %v1595
    %v2250 = vunpack.c.l.b16 %v1596
    %v2251 = vunpack.c.l.b16 %v1597
    %v2252 = vunpack.c.h.b16 %v1597
    %v2253 = vunpack.c.l.b16 %v1598
    %v2254 = vunpack.c.l.b16 %v1599
    %v2255 = vunpack.c.h.b16 %v1599
    %v2256 = vunpack.c.l.b16 %v1600
    %v2257 = vunpack.c.l.b16 %v1601
    %v2258 = vunpack.c.h.b16 %v1601
    %v2259 = vunpack.c.l.b16 %v1602
    %v2260 = vpack.c.b16 %v1879, %v1876
    %v2261 = vpack.c.b16 %v1880, %v1877
    %v2262 = vpack.c.b16 %v1881, %v1878
    %v2263 = vpack.c.b16 %v1885, %v1882
    %v2264 = vpack.c.b16 %v1886, %v1883
    %v2265 = vpack.c.b16 %v1887, %v1884
    %v2266 = vpack.c.b16 %v1891, %v1888
    %v2267 = vpack.c.b16 %v1892, %v1889
    %v2268 = vpack.c.b16 %v1893, %v1890
    %v2269 = vpack.c.b16 %v1897, %v1894
    %v2270 = vpack.c.b16 %v1898, %v1895
    %v2271 = vpack.c.b16 %v1899, %v1896
    %v2272 = vpack.c.b16 %v1903, %v1900
    %v2273 = vpack.c.b16 %v1904, %v1901
    %v2274 = vpack.c.b16 %v1905, %v1902
    %v2275 = vpack.c.b16 %v1909, %v1906
    %v2276 = vpack.c.b16 %v1910, %v1907
    %v2277 = vpack.c.b16 %v1911, %v1908
    %v2278 = vpack.c.b16 %v1915, %v1912
    %v2279 = vpack.c.b16 %v1916, %v1913
    %v2280 = vpack.c.b16 %v1917, %v1914
    %v2281 = vpack.c.b16 %v1921, %v1918
    %v2282 = vpack.c.b16 %v1922, %v1919
    %v2283 = vpack.c.b16 %v1923, %v1920
    %v2284 = vpack.c.b16 %v1927, %v1924
    %v2285 = vpack.c.b16 %v1928, %v1925
    %v2286 = vpack.c.b16 %v1929, %v1926
    %v2287 = vpack.c.b16 %v1933, %v1930
    %v2288 = vpack.c.b16 %v1934, %v1931
    %v2289 = vpack.c.b16 %v1935, %v1932
    %v2290 = vpack.c.b16 %v1939, %v1936
    %v2291 = vpack.c.b16 %v1940, %v1937
    %v2292 = vpack.c.b16 %v1941, %v1938
    %v2293 = vpack.c.b16 %v1945, %v1942
    %v2294 = vpack.c.b16 %v1946, %v1943
    %v2295 = vpack.c.b16 %v1947, %v1944
    %v2296 = vpack.c.b16 %v1951, %v1948
    %v2297 = vpack.c.b16 %v1952, %v1949
    %v2298 = vpack.c.b16 %v1953, %v1950
    %v2299 = vpack.c.b16 %v1957, %v1954
    %v2300 = vpack.c.b16 %v1958, %v1955
    %v2301 = vpack.c.b16 %v1959, %v1956
    %v2302 = vpack.c.b16 %v1963, %v1960
    %v2303 = vpack.c.b16 %v1964, %v1961
    %v2304 = vpack.c.b16 %v1965, %v1962
    %v2305 = vpack.c.b16 %v1969, %v1966
    %v2306 = vpack.c.b16 %v1970, %v1967
    %v2307 = vpack.c.b16 %v1971, %v1968
    %v2308 = vpack.c.b16 %v1975, %v1972
    %v2309 = vpack.c.b16 %v1976, %v1973
    %v2310 = vpack.c.b16 %v1977, %v1974
    %v2311 = vpack.c.b16 %v1981, %v1978
    %v2312 = vpack.c.b16 %v1982, %v1979
    %v2313 = vpack.c.b16 %v1983, %v1980
    %v2314 = vpack.c.b16 %v1987, %v1984
    %v2315 = vpack.c.b16 %v1988, %v1985
    %v2316 = vpack.c.b16 %v1989, %v1986
    %v2317 = vpack.c.b16 %v1993, %v1990
    %v2318 = vpack.c.b16 %v1994, %v1991
    %v2319 = vpack.c.b16 %v1995, %v1992
    %v2320 = vpack.c.b16 %v1999, %v1996
    %v2321 = vpack.c.b16 %v2000, %v1997
    %v2322 = vpack.c.b16 %v2001, %v1998
    %v2323 = vpack.c.b16 %v2005, %v2002
    %v2324 = vpack.c.b16 %v2006, %v2003
    %v2325 = vpack.c.b16 %v2007, %v2004
    %v2326 = vpack.c.b16 %v2011, %v2008
    %v2327 = vpack.c.b16 %v2012, %v2009
    %v2328 = vpack.c.b16 %v2013, %v2010
    %v2329 = vpack.c.b16 %v2017, %v2014
    %v2330 = vpack.c.b16 %v2018, %v2015
    %v2331 = vpack.c.b16 %v2019, %v2016
    %v2332 = vpack.c.b16 %v2023, %v2020
    %v2333 = vpack.c.b16 %v2024, %v2021
    %v2334 = vpack.c.b16 %v2025, %v2022
    %v2335 = vpack.c.b16 %v2029, %v2026
    %v2336 = vpack.c.b16 %v2030, %v2027
    %v2337 = vpack.c.b16 %v2031, %v2028
    %v2338 = vpack.c.b16 %v2035, %v2032
    %v2339 = vpack.c.b16 %v2036, %v2033
    %v2340 = vpack.c.b16 %v2037, %v2034
    %v2341 = vpack.c.b16 %v2041, %v2038
    %v2342 = vpack.c.b16 %v2042, %v2039
    %v2343 = vpack.c.b16 %v2043, %v2040
    %v2344 = vpack.c.b16 %v2047, %v2044
    %v2345 = vpack.c.b16 %v2048, %v2045
    %v2346 = vpack.c.b16 %v2049, %v2046
    %v2347 = vpack.c.b16 %v2053, %v2050
    %v2348 = vpack.c.b16 %v2054, %v2051
    %v2349 = vpack.c.b16 %v2055, %v2052
    %v2350 = vpack.c.b16 %v2059, %v2056
    %v2351 = vpack.c.b16 %v2060, %v2057
    %v2352 = vpack.c.b16 %v2061, %v2058
    %v2353 = vpack.c.b16 %v2065, %v2062
    %v2354 = vpack.c.b16 %v2066, %v2063
    %v2355 = vpack.c.b16 %v2067, %v2064
    %v2356 = vpack.c.b16 %v2071, %v2068
    %v2357 = vpack.c.b16 %v2072, %v2069
    %v2358 = vpack.c.b16 %v2073, %v2070
    %v2359 = vpack.c.b16 %v2077, %v2074
    %v2360 = vpack.c.b16 %v2078, %v2075
    %v2361 = vpack.c.b16 %v2079, %v2076
    %v2362 = vpack.c.b16 %v2083, %v2080
    %v2363 = vpack.c.b16 %v2084, %v2081
    %v2364 = vpack.c.b16 %v2085, %v2082
    %v2365 = vpack.c.b16 %v2089, %v2086
    %v2366 = vpack.c.b16 %v2090, %v2087
    %v2367 = vpack.c.b16 %v2091, %v2088
    %v2368 = vpack.c.b16 %v2095, %v2092
    %v2369 = vpack.c.b16 %v2096, %v2093
    %v2370 = vpack.c.b16 %v2097, %v2094
    %v2371 = vpack.c.b16 %v2101, %v2098
    %v2372 = vpack.c.b16 %v2102, %v2099
    %v2373 = vpack.c.b16 %v2103, %v2100
    %v2374 = vpack.c.b16 %v2107, %v2104
    %v2375 = vpack.c.b16 %v2108, %v2105
    %v2376 = vpack.c.b16 %v2109, %v2106
    %v2377 = vpack.c.b16 %v2113, %v2110
    %v2378 = vpack.c.b16 %v2114, %v2111
    %v2379 = vpack.c.b16 %v2115, %v2112
    %v2380 = vpack.c.b16 %v2119, %v2116
    %v2381 = vpack.c.b16 %v2120, %v2117
    %v2382 = vpack.c.b16 %v2121, %v2118
    %v2383 = vpack.c.b16 %v2125, %v2122
    %v2384 = vpack.c.b16 %v2126, %v2123
    %v2385 = vpack.c.b16 %v2127, %v2124
    %v2386 = vpack.c.b16 %v2131, %v2128
    %v2387 = vpack.c.b16 %v2132, %v2129
    %v2388 = vpack.c.b16 %v2133, %v2130
    %v2389 = vpack.c.b16 %v2137, %v2134
    %v2390 = vpack.c.b16 %v2138, %v2135
    %v2391 = vpack.c.b16 %v2139, %v2136
    %v2392 = vpack.c.b16 %v2143, %v2140
    %v2393 = vpack.c.b16 %v2144, %v2141
    %v2394 = vpack.c.b16 %v2145, %v2142
    %v2395 = vpack.c.b16 %v2149, %v2146
    %v2396 = vpack.c.b16 %v2150, %v2147
    %v2397 = vpack.c.b16 %v2151, %v2148
    %v2398 = vpack.c.b16 %v2155, %v2152
    %v2399 = vpack.c.b16 %v2156, %v2153
    %v2400 = vpack.c.b16 %v2157, %v2154
    %v2401 = vpack.c.b16 %v2161, %v2158
    %v2402 = vpack.c.b16 %v2162, %v2159
    %v2403 = vpack.c.b16 %v2163, %v2160
    %v2404 = vpack.c.b16 %v2167, %v2164
    %v2405 = vpack.c.b16 %v2168, %v2165
    %v2406 = vpack.c.b16 %v2169, %v2166
    %v2407 = vpack.c.b16 %v2173, %v2170
    %v2408 = vpack.c.b16 %v2174, %v2171
    %v2409 = vpack.c.b16 %v2175, %v2172
    %v2410 = vpack.c.b16 %v2179, %v2176
    %v2411 = vpack.c.b16 %v2180, %v2177
    %v2412 = vpack.c.b16 %v2181, %v2178
    %v2413 = vpack.c.b16 %v2185, %v2182
    %v2414 = vpack.c.b16 %v2186, %v2183
    %v2415 = vpack.c.b16 %v2187, %v2184
    %v2416 = vpack.c.b16 %v2191, %v2188
    %v2417 = vpack.c.b16 %v2192, %v2189
    %v2418 = vpack.c.b16 %v2193, %v2190
    %v2419 = vpack.c.b16 %v2197, %v2194
    %v2420 = vpack.c.b16 %v2198, %v2195
    %v2421 = vpack.c.b16 %v2199, %v2196
    %v2422 = vpack.c.b16 %v2203, %v2200
    %v2423 = vpack.c.b16 %v2204, %v2201
    %v2424 = vpack.c.b16 %v2205, %v2202
    %v2425 = vpack.c.b16 %v2209, %v2206
    %v2426 = vpack.c.b16 %v2210, %v2207
    %v2427 = vpack.c.b16 %v2211, %v2208
    %v2428 = vpack.c.b16 %v2215, %v2212
    %v2429 = vpack.c.b16 %v2216, %v2213
    %v2430 = vpack.c.b16 %v2217, %v2214
    %v2431 = vpack.c.b16 %v2221, %v2218
    %v2432 = vpack.c.b16 %v2222, %v2219
    %v2433 = vpack.c.b16 %v2223, %v2220
    %v2434 = vpack.c.b16 %v2227, %v2224
    %v2435 = vpack.c.b16 %v2228, %v2225
    %v2436 = vpack.c.b16 %v2229, %v2226
    %v2437 = vpack.c.b16 %v2233, %v2230
    %v2438 = vpack.c.b16 %v2234, %v2231
    %v2439 = vpack.c.b16 %v2235, %v2232
    %v2440 = vpack.c.b16 %v2239, %v2236
    %v2441 = vpack.c.b16 %v2240, %v2237
    %v2442 = vpack.c.b16 %v2241, %v2238
    %v2443 = vpack.c.b16 %v2245, %v2242
    %v2444 = vpack.c.b16 %v2246, %v2243
    %v2445 = vpack.c.b16 %v2247, %v2244
    %v2446 = vpack.c.b16 %v2251, %v2248
    %v2447 = vpack.c.b16 %v2252, %v2249
    %v2448 = vpack.c.b16 %v2253, %v2250
    %v2449 = vpack.c.b16 %v2257, %v2254
    %v2450 = vpack.c.b16 %v2258, %v2255
    %v2451 = vpack.c.b16 %v2259, %v2256
    %2644 = vmatprep.subr.bf16.mxu0 %v2261
    %2645 = vmatpush1.bf16.msra.mxu0 %v2260
    %2646 = vmatprep.subr.bf16.mxu0 %v2264
    %2647 = vmatpush1.bf16.msra.mxu0 %v2263
    %2648 = vmatprep.subr.bf16.mxu0 %v2267
    %2649 = vmatpush1.bf16.msra.mxu0 %v2266
    %2650 = vmatprep.subr.bf16.mxu0 %v2270
    %2651 = vmatpush1.bf16.msra.mxu0 %v2269
    %2652 = vmatprep.subr.bf16.mxu0 %v2273
    %2653 = vmatpush1.bf16.msra.mxu0 %v2272
    %2654 = vmatprep.subr.bf16.mxu0 %v2276
    %2655 = vmatpush1.bf16.msra.mxu0 %v2275
    %2656 = vmatprep.subr.bf16.mxu0 %v2279
    %2657 = vmatpush1.bf16.msra.mxu0 %v2278
    %2658 = vmatprep.subr.bf16.mxu0 %v2282
    %2659 = vmatpush1.bf16.msra.mxu0 %v2281
    %2660 = vmatprep.subr.bf16.mxu0 %v2285
    %2661 = vmatpush1.bf16.msra.mxu0 %v2284
    %2662 = vmatprep.subr.bf16.mxu0 %v2288
    %2663 = vmatpush1.bf16.msra.mxu0 %v2287
    %2664 = vmatprep.subr.bf16.mxu0 %v2291
    %2665 = vmatpush1.bf16.msra.mxu0 %v2290
    %2666 = vmatprep.subr.bf16.mxu0 %v2294
    %2667 = vmatpush1.bf16.msra.mxu0 %v2293
    %2668 = vmatprep.subr.bf16.mxu0 %v2297
    %2669 = vmatpush1.bf16.msra.mxu0 %v2296
    %2670 = vmatprep.subr.bf16.mxu0 %v2300
    %2671 = vmatpush1.bf16.msra.mxu0 %v2299
    %2672 = vmatprep.subr.bf16.mxu0 %v2303
    %2673 = vmatpush1.bf16.msra.mxu0 %v2302
    %2674 = vmatprep.subr.bf16.mxu0 %v2306
    %2675 = vmatpush1.bf16.msra.mxu0 %v2305
    %2676 = vmatprep.mubr.bf16.mxu0 %v1340
    %2677 = vmatmul.mubr.bf16.gmra.mrb[0].mxu0 %v1339
    %v2678 = vpop.f32.mrb[0].mxu0
    %v2679 = vadd.f32 %v1608, %v2678
    %v2680 = vpop.f32.mrb[0].mxu0
    %v2681 = vadd.f32 %v1612, %v2680
    %v2682 = vpop.f32.mrb[0].mxu0
    %v2683 = vpop.f32.mrb[0].mxu0
    %2684 = vdwg.mxu0
    %2685 = vmatprep.subr.bf16.mxu0 %v2309
    %2686 = vmatpush1.bf16.msra.mxu0 %v2308
    %2687 = vmatprep.subr.bf16.mxu0 %v2312
    %2688 = vmatpush1.bf16.msra.mxu0 %v2311
    %2689 = vmatprep.subr.bf16.mxu0 %v2315
    %2690 = vmatpush1.bf16.msra.mxu0 %v2314
    %2691 = vmatprep.subr.bf16.mxu0 %v2318
    %2692 = vmatpush1.bf16.msra.mxu0 %v2317
    %2693 = vmatprep.subr.bf16.mxu0 %v2321
    %2694 = vmatpush1.bf16.msra.mxu0 %v2320
    %2695 = vmatprep.subr.bf16.mxu0 %v2324
    %2696 = vmatpush1.bf16.msra.mxu0 %v2323
    %2697 = vmatprep.subr.bf16.mxu0 %v2327
    %2698 = vmatpush1.bf16.msra.mxu0 %v2326
    %2699 = vmatprep.subr.bf16.mxu0 %v2330
    %2700 = vmatpush1.bf16.msra.mxu0 %v2329
    %2701 = vmatprep.subr.bf16.mxu0 %v2333
    %2702 = vmatpush1.bf16.msra.mxu0 %v2332
    %2703 = vmatprep.subr.bf16.mxu0 %v2336
    %2704 = vmatpush1.bf16.msra.mxu0 %v2335
    %2705 = vmatprep.subr.bf16.mxu0 %v2339
    %2706 = vmatpush1.bf16.msra.mxu0 %v2338
    %2707 = vmatprep.subr.bf16.mxu0 %v2342
    %2708 = vmatpush1.bf16.msra.mxu0 %v2341
    %2709 = vmatprep.subr.bf16.mxu0 %v2345
    %2710 = vmatpush1.bf16.msra.mxu0 %v2344
    %2711 = vmatprep.subr.bf16.mxu0 %v2348
    %2712 = vmatpush1.bf16.msra.mxu0 %v2347
    %2713 = vmatprep.subr.bf16.mxu0 %v2351
    %2714 = vmatpush1.bf16.msra.mxu0 %v2350
    %2715 = vmatprep.subr.bf16.mxu0 %v2354
    %2716 = vmatpush1.bf16.msra.mxu0 %v2353
    %2717 = vmatprep.mubr.bf16.mxu0 %v1342
    %2718 = vmatmul.mubr.bf16.gmra.mrb[0].mxu0 %v1341
    %v2719 = vpop.f32.mrb[0].mxu0
    %v2720 = vadd.f32 %v2679, %v2719
    %v2721 = vpop.f32.mrb[0].mxu0
    %v2722 = vadd.f32 %v2681, %v2721
    %v2723 = vpop.f32.mrb[0].mxu0
    %v2724 = vpop.f32.mrb[0].mxu0
    %2725 = vdwg.mxu0
    %2726 = vmatprep.subr.bf16.mxu0 %v2357
    %2727 = vmatpush1.bf16.msra.mxu0 %v2356
    %2728 = vmatprep.subr.bf16.mxu0 %v2360
    %2729 = vmatpush1.bf16.msra.mxu0 %v2359
    %2730 = vmatprep.subr.bf16.mxu0 %v2363
    %2731 = vmatpush1.bf16.msra.mxu0 %v2362
    %2732 = vmatprep.subr.bf16.mxu0 %v2366
    %2733 = vmatpush1.bf16.msra.mxu0 %v2365
    %2734 = vmatprep.subr.bf16.mxu0 %v2369
    %2735 = vmatpush1.bf16.msra.mxu0 %v2368
    %2736 = vmatprep.subr.bf16.mxu0 %v2372
    %2737 = vmatpush1.bf16.msra.mxu0 %v2371
    %2738 = vmatprep.subr.bf16.mxu0 %v2375
    %2739 = vmatpush1.bf16.msra.mxu0 %v2374
    %2740 = vmatprep.subr.bf16.mxu0 %v2378
    %2741 = vmatpush1.bf16.msra.mxu0 %v2377
    %2742 = vmatprep.subr.bf16.mxu0 %v2381
    %2743 = vmatpush1.bf16.msra.mxu0 %v2380
    %2744 = vmatprep.subr.bf16.mxu0 %v2384
    %2745 = vmatpush1.bf16.msra.mxu0 %v2383
    %2746 = vmatprep.subr.bf16.mxu0 %v2387
    %2747 = vmatpush1.bf16.msra.mxu0 %v2386
    %2748 = vmatprep.subr.bf16.mxu0 %v2390
    %2749 = vmatpush1.bf16.msra.mxu0 %v2389
    %2750 = vmatprep.subr.bf16.mxu0 %v2393
    %2751 = vmatpush1.bf16.msra.mxu0 %v2392
    %2752 = vmatprep.subr.bf16.mxu0 %v2396
    %2753 = vmatpush1.bf16.msra.mxu0 %v2395
    %2754 = vmatprep.subr.bf16.mxu0 %v2399
    %2755 = vmatpush1.bf16.msra.mxu0 %v2398
    %2756 = vmatprep.subr.bf16.mxu0 %v2402
    %2757 = vmatpush1.bf16.msra.mxu0 %v2401
    %2758 = vmatprep.mubr.bf16.mxu0 %v1344
    %2759 = vmatmul.mubr.bf16.gmra.mrb[0].mxu0 %v1343
    %v2760 = vpop.f32.mrb[0].mxu0
    %v2761 = vadd.f32 %v2720, %v2760
    %v2762 = vpop.f32.mrb[0].mxu0
    %v2763 = vadd.f32 %v2722, %v2762
    %v2764 = vpop.f32.mrb[0].mxu0
    %v2765 = vpop.f32.mrb[0].mxu0
    %2766 = vdwg.mxu0
    %2767 = vmatprep.subr.bf16.mxu0 %v2405
    %2768 = vmatpush1.bf16.msra.mxu0 %v2404
    %2769 = vmatprep.subr.bf16.mxu0 %v2408
    %2770 = vmatpush1.bf16.msra.mxu0 %v2407
    %2771 = vmatprep.subr.bf16.mxu0 %v2411
    %2772 = vmatpush1.bf16.msra.mxu0 %v2410
    %2773 = vmatprep.subr.bf16.mxu0 %v2414
    %2774 = vmatpush1.bf16.msra.mxu0 %v2413
    %2775 = vmatprep.subr.bf16.mxu0 %v2417
    %2776 = vmatpush1.bf16.msra.mxu0 %v2416
    %2777 = vmatprep.subr.bf16.mxu0 %v2420
    %2778 = vmatpush1.bf16.msra.mxu0 %v2419
    %2779 = vmatprep.subr.bf16.mxu0 %v2423
    %2780 = vmatpush1.bf16.msra.mxu0 %v2422
    %2781 = vmatprep.subr.bf16.mxu0 %v2426
    %2782 = vmatpush1.bf16.msra.mxu0 %v2425
    %2783 = vmatprep.subr.bf16.mxu0 %v2429
    %2784 = vmatpush1.bf16.msra.mxu0 %v2428
    %2785 = vmatprep.subr.bf16.mxu0 %v2432
    %2786 = vmatpush1.bf16.msra.mxu0 %v2431
    %2787 = vmatprep.subr.bf16.mxu0 %v2435
    %2788 = vmatpush1.bf16.msra.mxu0 %v2434
    %2789 = vmatprep.subr.bf16.mxu0 %v2438
    %2790 = vmatpush1.bf16.msra.mxu0 %v2437
    %2791 = vmatprep.subr.bf16.mxu0 %v2441
    %2792 = vmatpush1.bf16.msra.mxu0 %v2440
    %2793 = vmatprep.subr.bf16.mxu0 %v2444
    %2794 = vmatpush1.bf16.msra.mxu0 %v2443
    %2795 = vmatprep.subr.bf16.mxu0 %v2447
    %2796 = vmatpush1.bf16.msra.mxu0 %v2446
    %2797 = vmatprep.subr.bf16.mxu0 %v2450
    %2798 = vmatpush1.bf16.msra.mxu0 %v2449
    %2799 = vmatprep.mubr.bf16.mxu0 %v1346
    %2800 = vmatmul.mubr.bf16.gmra.mrb[0].mxu0 %v1345
    %v2801 = vpop.f32.mrb[0].mxu0
    %v2802 = vadd.f32 %v2761, %v2801
    %v2803 = vpop.f32.mrb[0].mxu0
    %v2804 = vadd.f32 %v2763, %v2803
    %v2805 = vpop.f32.mrb[0].mxu0
    %v2806 = vpop.f32.mrb[0].mxu0
    %2807 = vdwg.mxu0
    %2808 = vmatprep.subr.bf16.mxu0 0
    %2809 = vmatpush1.bf16.msra.mxu0 %v2262
    %2810 = vmatprep.subr.bf16.mxu0 0
    %2811 = vmatpush1.bf16.msra.mxu0 %v2265
    %2812 = vmatprep.subr.bf16.mxu0 0
    %2813 = vmatpush1.bf16.msra.mxu0 %v2268
    %2814 = vmatprep.subr.bf16.mxu0 0
    %2815 = vmatpush1.bf16.msra.mxu0 %v2271
    %2816 = vmatprep.subr.bf16.mxu0 0
    %2817 = vmatpush1.bf16.msra.mxu0 %v2274
    %2818 = vmatprep.subr.bf16.mxu0 0
    %2819 = vmatpush1.bf16.msra.mxu0 %v2277
    %2820 = vmatprep.subr.bf16.mxu0 0
    %2821 = vmatpush1.bf16.msra.mxu0 %v2280
    %2822 = vmatprep.subr.bf16.mxu0 0
    %2823 = vmatpush1.bf16.msra.mxu0 %v2283
    %2824 = vmatprep.subr.bf16.mxu0 0
    %2825 = vmatpush1.bf16.msra.mxu0 %v2286
    %2826 = vmatprep.subr.bf16.mxu0 0
    %2827 = vmatpush1.bf16.msra.mxu0 %v2289
    %2828 = vmatprep.subr.bf16.mxu0 0
    %2829 = vmatpush1.bf16.msra.mxu0 %v2292
    %2830 = vmatprep.subr.bf16.mxu0 0
    %2831 = vmatpush1.bf16.msra.mxu0 %v2295
    %2832 = vmatprep.subr.bf16.mxu0 0
    %2833 = vmatpush1.bf16.msra.mxu0 %v2298
    %2834 = vmatprep.subr.bf16.mxu0 0
    %2835 = vmatpush1.bf16.msra.mxu0 %v2301
    %2836 = vmatprep.subr.bf16.mxu0 0
    %2837 = vmatpush1.bf16.msra.mxu0 %v2304
    %2838 = vmatprep.subr.bf16.mxu0 0
    %2839 = vmatpush1.bf16.msra.mxu0 %v2307
    %2840 = vmatprep.mubr.bf16.mxu0 %v1340
    %2841 = vmatmul.mubr.bf16.gmra.mrb[0].mxu0 %v1339
    %v2842 = vpop.f32.mrb[0].mxu0
    %v2843 = vadd.f32 %v1616, %v2842
    %v2844 = vpop.f32.mrb[0].mxu0
    %v2845 = vpop.f32.mrb[0].mxu0
    %v2846 = vpop.f32.mrb[0].mxu0
    %2847 = vdwg.mxu0
    %2848 = vmatprep.subr.bf16.mxu0 0
    %2849 = vmatpush1.bf16.msra.mxu0 %v2310
    %2850 = vmatprep.subr.bf16.mxu0 0
    %2851 = vmatpush1.bf16.msra.mxu0 %v2313
    %2852 = vmatprep.subr.bf16.mxu0 0
    %2853 = vmatpush1.bf16.msra.mxu0 %v2316
    %2854 = vmatprep.subr.bf16.mxu0 0
    %2855 = vmatpush1.bf16.msra.mxu0 %v2319
    %2856 = vmatprep.subr.bf16.mxu0 0
    %2857 = vmatpush1.bf16.msra.mxu0 %v2322
    %2858 = vmatprep.subr.bf16.mxu0 0
    %2859 = vmatpush1.bf16.msra.mxu0 %v2325
    %2860 = vmatprep.subr.bf16.mxu0 0
    %2861 = vmatpush1.bf16.msra.mxu0 %v2328
    %2862 = vmatprep.subr.bf16.mxu0 0
    %2863 = vmatpush1.bf16.msra.mxu0 %v2331
    %2864 = vmatprep.subr.bf16.mxu0 0
    %2865 = vmatpush1.bf16.msra.mxu0 %v2334
    %2866 = vmatprep.subr.bf16.mxu0 0
    %2867 = vmatpush1.bf16.msra.mxu0 %v2337
    %2868 = vmatprep.subr.bf16.mxu0 0
    %2869 = vmatpush1.bf16.msra.mxu0 %v2340
    %2870 = vmatprep.subr.bf16.mxu0 0
    %2871 = vmatpush1.bf16.msra.mxu0 %v2343
    %2872 = vmatprep.subr.bf16.mxu0 0
    %2873 = vmatpush1.bf16.msra.mxu0 %v2346
    %2874 = vmatprep.subr.bf16.mxu0 0
    %2875 = vmatpush1.bf16.msra.mxu0 %v2349
    %2876 = vmatprep.subr.bf16.mxu0 0
    %2877 = vmatpush1.bf16.msra.mxu0 %v2352
    %2878 = vmatprep.subr.bf16.mxu0 0
    %2879 = vmatpush1.bf16.msra.mxu0 %v2355
    %2880 = vmatprep.mubr.bf16.mxu0 %v1342
    %2881 = vmatmul.mubr.bf16.gmra.mrb[0].mxu0 %v1341
    %v2882 = vpop.f32.mrb[0].mxu0
    %v2883 = vadd.f32 %v2843, %v2882
    %v2884 = vpop.f32.mrb[0].mxu0
    %v2885 = vpop.f32.mrb[0].mxu0
    %v2886 = vpop.f32.mrb[0].mxu0
    %2887 = vdwg.mxu0
    %2888 = vmatprep.subr.bf16.mxu0 0
    %2889 = vmatpush1.bf16.msra.mxu0 %v2358
    %2890 = vmatprep.subr.bf16.mxu0 0
    %2891 = vmatpush1.bf16.msra.mxu0 %v2361
    %2892 = vmatprep.subr.bf16.mxu0 0
    %2893 = vmatpush1.bf16.msra.mxu0 %v2364
    %2894 = vmatprep.subr.bf16.mxu0 0
    %2895 = vmatpush1.bf16.msra.mxu0 %v2367
    %2896 = vmatprep.subr.bf16.mxu0 0
    %2897 = vmatpush1.bf16.msra.mxu0 %v2370
    %2898 = vmatprep.subr.bf16.mxu0 0
    %2899 = vmatpush1.bf16.msra.mxu0 %v2373
    %2900 = vmatprep.subr.bf16.mxu0 0
    %2901 = vmatpush1.bf16.msra.mxu0 %v2376
    %2902 = vmatprep.subr.bf16.mxu0 0
    %2903 = vmatpush1.bf16.msra.mxu0 %v2379
    %2904 = vmatprep.subr.bf16.mxu0 0
    %2905 = vmatpush1.bf16.msra.mxu0 %v2382
    %2906 = vmatprep.subr.bf16.mxu0 0
    %2907 = vmatpush1.bf16.msra.mxu0 %v2385
    %2908 = vmatprep.subr.bf16.mxu0 0
    %2909 = vmatpush1.bf16.msra.mxu0 %v2388
    %2910 = vmatprep.subr.bf16.mxu0 0
    %2911 = vmatpush1.bf16.msra.mxu0 %v2391
    %2912 = vmatprep.subr.bf16.mxu0 0
    %2913 = vmatpush1.bf16.msra.mxu0 %v2394
    %2914 = vmatprep.subr.bf16.mxu0 0
    %2915 = vmatpush1.bf16.msra.mxu0 %v2397
    %2916 = vmatprep.subr.bf16.mxu0 0
    %2917 = vmatpush1.bf16.msra.mxu0 %v2400
    %2918 = vmatprep.subr.bf16.mxu0 0
    %2919 = vmatpush1.bf16.msra.mxu0 %v2403
    %2920 = vmatprep.mubr.bf16.mxu0 %v1344
    %2921 = vmatmul.mubr.bf16.gmra.mrb[0].mxu0 %v1343
    %v2922 = vpop.f32.mrb[0].mxu0
    %v2923 = vadd.f32 %v2883, %v2922
    %v2924 = vpop.f32.mrb[0].mxu0
    %v2925 = vpop.f32.mrb[0].mxu0
    %v2926 = vpop.f32.mrb[0].mxu0
    %2927 = vdwg.mxu0
    %2928 = vmatprep.subr.bf16.mxu0 0
    %2929 = vmatpush1.bf16.msra.mxu0 %v2406
    %2930 = vmatprep.subr.bf16.mxu0 0
    %2931 = vmatpush1.bf16.msra.mxu0 %v2409
    %2932 = vmatprep.subr.bf16.mxu0 0
    %2933 = vmatpush1.bf16.msra.mxu0 %v2412
    %2934 = vmatprep.subr.bf16.mxu0 0
    %2935 = vmatpush1.bf16.msra.mxu0 %v2415
    %2936 = vmatprep.subr.bf16.mxu0 0
    %2937 = vmatpush1.bf16.msra.mxu0 %v2418
    %2938 = vmatprep.subr.bf16.mxu0 0
    %2939 = vmatpush1.bf16.msra.mxu0 %v2421
    %2940 = vmatprep.subr.bf16.mxu0 0
    %2941 = vmatpush1.bf16.msra.mxu0 %v2424
    %2942 = vmatprep.subr.bf16.mxu0 0
    %2943 = vmatpush1.bf16.msra.mxu0 %v2427
    %2944 = vmatprep.subr.bf16.mxu0 0
    %2945 = vmatpush1.bf16.msra.mxu0 %v2430
    %2946 = vmatprep.subr.bf16.mxu0 0
    %2947 = vmatpush1.bf16.msra.mxu0 %v2433
    %2948 = vmatprep.subr.bf16.mxu0 0
    %2949 = vmatpush1.bf16.msra.mxu0 %v2436
    %2950 = vmatprep.subr.bf16.mxu0 0
    %2951 = vmatpush1.bf16.msra.mxu0 %v2439
    %2952 = vmatprep.subr.bf16.mxu0 0
    %2953 = vmatpush1.bf16.msra.mxu0 %v2442
    %2954 = vmatprep.subr.bf16.mxu0 0
    %2955 = vmatpush1.bf16.msra.mxu0 %v2445
    %2956 = vmatprep.subr.bf16.mxu0 0
    %2957 = vmatpush1.bf16.msra.mxu0 %v2448
    %2958 = vmatprep.subr.bf16.mxu0 0
    %2959 = vmatpush1.bf16.msra.mxu0 %v2451
    %2960 = vmatprep.mubr.bf16.mxu0 %v1346
    %2961 = vmatmul.mubr.bf16.gmra.mrb[0].mxu0 %v1345
    %v2962 = vpop.f32.mrb[0].mxu0
    %v2963 = vadd.f32 %v2923, %v2962
    %v2964 = vpop.f32.mrb[0].mxu0
    %v2965 = vpop.f32.mrb[0].mxu0
    %v2966 = vpop.f32.mrb[0].mxu0
    %2967 = vdwg.mxu0
    %2968 = vst [vmem:[#allocation11] sm:$0xff] %v2802
    %2969 = vst [vmem:[#allocation11 + $0x8] sm:$0xff] %v2804
    %vm2970 = vcmask 736256
    %2971 = vst.msk [vmem:[#allocation11 + $0x10] sm:$0xff] %vm2970, %v2963
    // Predicated region
    $region42: #{tpu_custom_call.1} parent=1 // pred_check
      _
    $region43: #{tpu_custom_call.1} parent=1 // pred_check_branch
      %2973 = sbr.rel (0) target = $region45
    $region44: #{tpu_custom_call.1} parent=1 // pred_region
      %s2975 = ssub.s32 384, 384
      %2976 = vsyncadd [#allocation4], %s2975
      %s2978 = sshll.u32 [#allocation11], 4
      %s2979 = int_to_ptr.vmem [resolvable:$true] %s2978
      %2981 = dma.vmem_to_hbm [thread:$0]  %s2979, 384, %s5, [#allocation4]
    $region45: #{tpu_custom_call.1} parent=1 // pred_fallthru
      _
    // Predicated region
    $region46: #{tpu_custom_call.1} parent=1 // pred_check
      _
    $region47: #{tpu_custom_call.1} parent=1 // pred_check_branch
      %2983 = sbr.rel (0) target = $region49
    $region48: #{tpu_custom_call.1} parent=1 // pred_region
      %2984 = dma.done [#allocation4], 384
    $region49: #{tpu_custom_call.1} parent=1 // pred_fallthru
      _
    %2985 = vsyncpa [#allocation3], 1
    %2986 = vsyncpa [#allocation6], 1
    %2987 = vsyncpa [#allocation9], 1
    %2988 = vsyncpa [#allocation4], 1

</llo_original>
